<compile_context>
chip_gen: v5e
topology: v5e:2x2
jax: 0.10.0
libtpu: 0.0.40
codegen_flags: <defaults>
</compile_context>

<pallas_src>
import functools

import jax
import jax.numpy as jnp
from jax.experimental import pallas as pl
from jax.experimental.pallas import tpu as pltpu


# ----------------------------------------------------------------------------
# Pallas kernel: batched anchor computation over a block of Bt batch elements.
# ----------------------------------------------------------------------------
def _anchor_kernel(x_ref, o_ref, *, dimen, n_shot, unroll_mac):
    x = x_ref[...]                                     # (Bt, N, Dt)
    xf = x.astype(jnp.float32)
    _, N, Dt = xf.shape

    # Masks on trailing dims only; batch axis handled by broadcasting.
    row = jax.lax.broadcasted_iota(jnp.int32, (1, N, Dt), 1)
    col = jax.lax.broadcasted_iota(jnp.int32, (1, N, Dt), 2)
    is_feat_col = col < dimen                          # feature columns
    is_support = row > 0                               # labeled support rows
    update = jnp.logical_and(is_support, is_feat_col)

    # Only the labels operand needs masking (row 0 and feature columns zeroed);
    # feeding raw xf into the second contraction is fine because the
    # contaminated entries are discarded by the final select.
    labels = jnp.where(
        jnp.logical_and(is_support, jnp.logical_not(is_feat_col)), xf, 0.0
    )                                                  # (Bt, N, Dt)

    # Reassociated Gram form:
    #   labels @ ((labels^T @ feats) / n_shot) == ((labels @ labels^T)/n_shot) @ feats
    # gram is (Bt, N, N); the 1/n_shot and 0.5 blend scalars are folded in.
    gram = jnp.einsum(
        "bnc,bmc->bnm", labels, labels, preferred_element_type=jnp.float32
    ) * jnp.float32(0.5 / n_shot)

    if unroll_mac:
        # N is tiny: a handful of VPU FMAs on resident vregs beats Bt tiny MXU
        # matmuls.  Column 0 of gram is exactly zero (row 0 of labels is
        # zeroed), so the m=0 term is skipped.
        blended = 0.5 * xf
        for m in range(1, N):
            blended = blended + gram[:, :, m:m + 1] * xf[:, m:m + 1, :]
    else:
        anchor_half = jnp.einsum(
            "bnm,bmd->bnd", gram, xf, preferred_element_type=jnp.float32
        )
        blended = anchor_half + 0.5 * xf

    o_ref[...] = jnp.where(update, blended, xf).astype(o_ref.dtype)


# ----------------------------------------------------------------------------
# Wrapper
# ----------------------------------------------------------------------------
def _pick_block_batch(B, N, Dt, budget_bytes):
    """Largest Bt fitting a VMEM budget (fewest grid steps), capped at 512."""
    n_pad = ((N + 7) // 8) * 8
    d_pad = ((Dt + 127) // 128) * 128
    # ~2x double-buffered input + 2x output blocks plus ~6 full-tile f32
    # intermediates (xf, labels, blended, select temporaries) and the Gram tile.
    per_elem = 10 * n_pad * d_pad * 4 + 2 * n_pad * n_pad * 4
    cap = max(1, budget_bytes // per_elem)
    return int(min(B, cap, 512))


def anchor_forward(x, *, dimen, n_way, n_shot, vmem_budget_bytes=40 * 1024 * 1024):
    """Pallas implementation of Anchor.forward. x: (B, N, dimen + n_way)."""
    B, N, Dt = x.shape
    assert Dt == dimen + n_way

    Bt = _pick_block_batch(B, N, Dt, vmem_budget_bytes)
    grid = pl.cdiv(B, Bt)
    Bp = grid * Bt
    x_in = x if Bp == B else jnp.pad(x, ((0, Bp - B), (0, 0), (0, 0)))

    kernel = functools.partial(
        _anchor_kernel, dimen=dimen, n_shot=n_shot, unroll_mac=(N <= 32)
    )
    out = pl.pallas_call(
        kernel,
        out_shape=jax.ShapeDtypeStruct((Bp, N, Dt), x.dtype),
        grid_spec=pltpu.PrefetchScalarGridSpec(
            num_scalar_prefetch=0,
            grid=(grid,),
            # Last two block dims equal the full array dims, so the (8,128)
            # divisibility rule does not apply; only the batch axis is tiled.
            in_specs=[pl.BlockSpec((Bt, N, Dt), lambda b: (b, 0, 0))],
            out_specs=pl.BlockSpec((Bt, N, Dt), lambda b: (b, 0, 0)),
        ),
        compiler_params=pltpu.CompilerParams(
            dimension_semantics=("parallel",),
            vmem_limit_bytes=48 * 1024 * 1024,
        ),
    )(x_in)
    if Bp != B:
        out = out[:B]
    return out


# ----------------------------------------------------------------------------
# Pure-JAX reference (mirrors the PyTorch forward exactly) for verification.
# ----------------------------------------------------------------------------
def anchor_forward_ref(x, *, dimen, n_way, n_shot):
    x_unl = x[:, 0:1, :]
    x_l = x[:, 1:, :]
    x_label = x_l[:, :, -n_way:]
    x_feat = x_l[:, :, :-n_way]
    x_anchor = jnp.einsum("bnc,bnd->bcd", x_label, x_feat) / n_shot
    x_anchor = jnp.einsum("bnc,bcd->bnd", x_label, x_anchor)
    x_output = 0.5 * x_anchor + 0.5 * x_feat
    out = jnp.concatenate([x_output, x_label], axis=2)
    out = jnp.concatenate([x_unl, out], axis=1)
    return out


if __name__ == "__main__":
    # Small shapes consistent with the module.
    n_way, n_shot, batch_size, dimen = 4, 2, 16, 32
    N = 1 + n_way * n_shot          # 1 unlabeled query + support set
    Dt = dimen + n_way              # features + one-hot label

    key = jax.random.PRNGKey(0)
    k_feat, _ = jax.random.split(key)

    # Features random; labels one-hot for support rows, zeros for row 0.
    feats = jax.random.normal(k_feat, (batch_size, N, dimen), jnp.float32)
    support_classes = jnp.tile(jnp.arange(n_way), n_shot)          # (n_way*n_shot,)
    support_onehot = jax.nn.one_hot(support_classes, n_way, dtype=jnp.float32)
    labels = jnp.concatenate(
        [jnp.zeros((1, n_way), jnp.float32), support_onehot], axis=0
    )                                                              # (N, n_way)
    labels = jnp.broadcast_to(labels[None], (batch_size, N, n_way))
    x = jnp.concatenate([feats, labels], axis=-1)                  # (B, N, Dt)

    out = anchor_forward(x, dimen=dimen, n_way=n_way, n_shot=n_shot)
    out = jax.block_until_ready(out)

    ref = anchor_forward_ref(x, dimen=dimen, n_way=n_way, n_shot=n_shot)
    assert out.shape == (batch_size, N, Dt)
    assert jnp.allclose(out, ref, atol=1e-5, rtol=1e-5)

    print("KERNEL_OK")
</pallas_src>

<mosaic_0001>
module attributes {stable_mosaic.version = 11 : i64} {
  func.func @_anchor_kernel(%arg0: i32, %arg1: memref<16x9x36xf32, #tpu.memory_space<vmem>>, %arg2: memref<16x9x36xf32, #tpu.memory_space<vmem>>) attributes {dimension_semantics = [#tpu.dimension_semantics<parallel>], iteration_bounds = array<i64: 1>, scalar_prefetch = 0 : i64, scratch_operands = 0 : i64, tpu.core_type = #tpu.core_type<tc>, window_params = [{transform_indices = @transform_0, window_bounds = array<i64: 16, 9, 36>}, {transform_indices = @transform_1, window_bounds = array<i64: 16, 9, 36>}]} {
    %c0 = arith.constant 0 : index
    %c0_0 = arith.constant 0 : index
    %c0_1 = arith.constant 0 : index
    %0 = vector.load %arg1[%c0, %c0_0, %c0_1] : memref<16x9x36xf32, #tpu.memory_space<vmem>>, vector<16x9x36xf32>
    %1 = tpu.iota {dimensions = array<i32: 1>} : vector<1x9x36xi32>
    %2 = tpu.iota {dimensions = array<i32: 2>} : vector<1x9x36xi32>
    %c32_i32 = arith.constant 32 : i32
    %3 = vector.broadcast %c32_i32 : i32 to vector<1x9x36xi32>
    %4 = arith.cmpi slt, %2, %3 : vector<1x9x36xi32>
    %c0_i32 = arith.constant 0 : i32
    %5 = vector.broadcast %c0_i32 : i32 to vector<1x9x36xi32>
    %6 = arith.cmpi sgt, %1, %5 : vector<1x9x36xi32>
    %7 = arith.andi %6, %4 : vector<1x9x36xi1>
    %cst = arith.constant dense<true> : vector<1x9x36xi1>
    %8 = arith.xori %4, %cst : vector<1x9x36xi1>
    %9 = arith.andi %6, %8 : vector<1x9x36xi1>
    %cst_2 = arith.constant 0.000000e+00 : f32
    %10 = vector.shape_cast %9 : vector<1x9x36xi1> to vector<1x9x36xi1>
    %11 = vector.broadcast %10 : vector<1x9x36xi1> to vector<16x9x36xi1>
    %12 = vector.broadcast %cst_2 : f32 to vector<16x9x36xf32>
    %13 = arith.select %11, %0, %12 : vector<16x9x36xi1>, vector<16x9x36xf32>
    "tpu.trace_start"() <{level = 10 : i32, message = "bnc,bmc->bnm"}> : () -> ()
    %cst_3 = arith.constant dense<0.000000e+00> : vector<16x9x9xf32>
    %14 = tpu.matmul %13, %13, %cst_3 {dimension_numbers = #tpu.dot_dimension_numbers<[2], [2], [1], [1], [0, 0, 0, 1, 1, 1], [0], [0]>} : vector<16x9x36xf32>, vector<16x9x36xf32>, vector<16x9x9xf32> -> vector<16x9x9xf32>
    "tpu.trace_stop"() : () -> ()
    %cst_4 = arith.constant 2.500000e-01 : f32
    %15 = vector.broadcast %cst_4 : f32 to vector<16x9x9xf32>
    %16 = arith.mulf %14, %15 : vector<16x9x9xf32>
    %cst_5 = arith.constant 5.000000e-01 : f32
    %17 = vector.broadcast %cst_5 : f32 to vector<16x9x36xf32>
    %18 = arith.mulf %17, %0 : vector<16x9x36xf32>
    %19 = vector.extract_strided_slice %16 {offsets = [0, 0, 1], sizes = [16, 9, 1], strides = [1, 1, 1]} : vector<16x9x9xf32> to vector<16x9x1xf32>
    %20 = vector.extract_strided_slice %0 {offsets = [0, 1, 0], sizes = [16, 1, 36], strides = [1, 1, 1]} : vector<16x9x36xf32> to vector<16x1x36xf32>
    %21 = vector.broadcast %19 : vector<16x9x1xf32> to vector<16x9x36xf32>
    %22 = vector.broadcast %20 : vector<16x1x36xf32> to vector<16x9x36xf32>
    %23 = arith.mulf %21, %22 : vector<16x9x36xf32>
    %24 = arith.addf %18, %23 : vector<16x9x36xf32>
    %25 = vector.extract_strided_slice %16 {offsets = [0, 0, 2], sizes = [16, 9, 1], strides = [1, 1, 1]} : vector<16x9x9xf32> to vector<16x9x1xf32>
    %26 = vector.extract_strided_slice %0 {offsets = [0, 2, 0], sizes = [16, 1, 36], strides = [1, 1, 1]} : vector<16x9x36xf32> to vector<16x1x36xf32>
    %27 = vector.broadcast %25 : vector<16x9x1xf32> to vector<16x9x36xf32>
    %28 = vector.broadcast %26 : vector<16x1x36xf32> to vector<16x9x36xf32>
    %29 = arith.mulf %27, %28 : vector<16x9x36xf32>
    %30 = arith.addf %24, %29 : vector<16x9x36xf32>
    %31 = vector.extract_strided_slice %16 {offsets = [0, 0, 3], sizes = [16, 9, 1], strides = [1, 1, 1]} : vector<16x9x9xf32> to vector<16x9x1xf32>
    %32 = vector.extract_strided_slice %0 {offsets = [0, 3, 0], sizes = [16, 1, 36], strides = [1, 1, 1]} : vector<16x9x36xf32> to vector<16x1x36xf32>
    %33 = vector.broadcast %31 : vector<16x9x1xf32> to vector<16x9x36xf32>
    %34 = vector.broadcast %32 : vector<16x1x36xf32> to vector<16x9x36xf32>
    %35 = arith.mulf %33, %34 : vector<16x9x36xf32>
    %36 = arith.addf %30, %35 : vector<16x9x36xf32>
    %37 = vector.extract_strided_slice %16 {offsets = [0, 0, 4], sizes = [16, 9, 1], strides = [1, 1, 1]} : vector<16x9x9xf32> to vector<16x9x1xf32>
    %38 = vector.extract_strided_slice %0 {offsets = [0, 4, 0], sizes = [16, 1, 36], strides = [1, 1, 1]} : vector<16x9x36xf32> to vector<16x1x36xf32>
    %39 = vector.broadcast %37 : vector<16x9x1xf32> to vector<16x9x36xf32>
    %40 = vector.broadcast %38 : vector<16x1x36xf32> to vector<16x9x36xf32>
    %41 = arith.mulf %39, %40 : vector<16x9x36xf32>
    %42 = arith.addf %36, %41 : vector<16x9x36xf32>
    %43 = vector.extract_strided_slice %16 {offsets = [0, 0, 5], sizes = [16, 9, 1], strides = [1, 1, 1]} : vector<16x9x9xf32> to vector<16x9x1xf32>
    %44 = vector.extract_strided_slice %0 {offsets = [0, 5, 0], sizes = [16, 1, 36], strides = [1, 1, 1]} : vector<16x9x36xf32> to vector<16x1x36xf32>
    %45 = vector.broadcast %43 : vector<16x9x1xf32> to vector<16x9x36xf32>
    %46 = vector.broadcast %44 : vector<16x1x36xf32> to vector<16x9x36xf32>
    %47 = arith.mulf %45, %46 : vector<16x9x36xf32>
    %48 = arith.addf %42, %47 : vector<16x9x36xf32>
    %49 = vector.extract_strided_slice %16 {offsets = [0, 0, 6], sizes = [16, 9, 1], strides = [1, 1, 1]} : vector<16x9x9xf32> to vector<16x9x1xf32>
    %50 = vector.extract_strided_slice %0 {offsets = [0, 6, 0], sizes = [16, 1, 36], strides = [1, 1, 1]} : vector<16x9x36xf32> to vector<16x1x36xf32>
    %51 = vector.broadcast %49 : vector<16x9x1xf32> to vector<16x9x36xf32>
    %52 = vector.broadcast %50 : vector<16x1x36xf32> to vector<16x9x36xf32>
    %53 = arith.mulf %51, %52 : vector<16x9x36xf32>
    %54 = arith.addf %48, %53 : vector<16x9x36xf32>
    %55 = vector.extract_strided_slice %16 {offsets = [0, 0, 7], sizes = [16, 9, 1], strides = [1, 1, 1]} : vector<16x9x9xf32> to vector<16x9x1xf32>
    %56 = vector.extract_strided_slice %0 {offsets = [0, 7, 0], sizes = [16, 1, 36], strides = [1, 1, 1]} : vector<16x9x36xf32> to vector<16x1x36xf32>
    %57 = vector.broadcast %55 : vector<16x9x1xf32> to vector<16x9x36xf32>
    %58 = vector.broadcast %56 : vector<16x1x36xf32> to vector<16x9x36xf32>
    %59 = arith.mulf %57, %58 : vector<16x9x36xf32>
    %60 = arith.addf %54, %59 : vector<16x9x36xf32>
    %61 = vector.extract_strided_slice %16 {offsets = [0, 0, 8], sizes = [16, 9, 1], strides = [1, 1, 1]} : vector<16x9x9xf32> to vector<16x9x1xf32>
    %62 = vector.extract_strided_slice %0 {offsets = [0, 8, 0], sizes = [16, 1, 36], strides = [1, 1, 1]} : vector<16x9x36xf32> to vector<16x1x36xf32>
    %63 = vector.broadcast %61 : vector<16x9x1xf32> to vector<16x9x36xf32>
    %64 = vector.broadcast %62 : vector<16x1x36xf32> to vector<16x9x36xf32>
    %65 = arith.mulf %63, %64 : vector<16x9x36xf32>
    %66 = arith.addf %60, %65 : vector<16x9x36xf32>
    %67 = vector.shape_cast %7 : vector<1x9x36xi1> to vector<1x9x36xi1>
    %68 = vector.broadcast %67 : vector<1x9x36xi1> to vector<16x9x36xi1>
    %69 = arith.select %68, %66, %0 : vector<16x9x36xi1>, vector<16x9x36xf32>
    %c0_6 = arith.constant 0 : index
    %c0_7 = arith.constant 0 : index
    %c0_8 = arith.constant 0 : index
    %70 = vector.load %arg2[%c0_6, %c0_7, %c0_8] : memref<16x9x36xf32, #tpu.memory_space<vmem>>, vector<16x9x36xf32>
    tpu.vector_store %arg2[%c0_6, %c0_7, %c0_8], %69 {strides = array<i32>} : memref<16x9x36xf32, #tpu.memory_space<vmem>>, vector<16x9x36xf32>,
    return
  }
  func.func @transform_0(%arg0: i32) -> (i32, i32, i32) {
    %c0_i32 = arith.constant 0 : i32
    %c0_i32_0 = arith.constant 0 : i32
    %c0_i32_1 = arith.constant 0 : i32
    return %arg0, %c0_i32, %c0_i32_0 : i32, i32, i32
  }
  func.func @transform_1(%arg0: i32) -> (i32, i32, i32) {
    %c0_i32 = arith.constant 0 : i32
    %c0_i32_0 = arith.constant 0 : i32
    %c0_i32_1 = arith.constant 0 : i32
    return %arg0, %c0_i32, %c0_i32_0 : i32, i32, i32
  }
}

</mosaic_0001>

<llo_original>
// kernel: tpu_custom_call.1
$region0: #{tpu_custom_call.1}
  #allocation0 [shape = 'u32[]', space=smem, size = 0x4, offset = 0x4, fixed_abs, tag = 'smem constant byte address 0x4 - core index']
  #allocation1 [shape = 'u32[72,128]{1,0:T(1,128)}', space=vmem, size = 0x9000, scoped, tag = 'internal scratch']
  %s0 = inlined_call_operand.vmem [shape: f32[16,9,36], index: 0, kind: input, shape index: {}]
  %s1 = inlined_call_operand.vmem [shape: f32[16,9,36], index: 1, kind: output, shape index: {}]
  %s2 = sld [smem:[#allocation0]]
  $region14: #{tpu_custom_call.1} parent=0
    _
  %s4 = ssub.s32 1, %s2
  %s5 = scalar_select 0, %s4, %s2
  // Predicated region
  $region2: #{tpu_custom_call.1} parent=0 // pred_check
    _
  $region3: #{tpu_custom_call.1} parent=0 // pred_check_branch
    %7 = sbr.rel (0) target = $region5
  $region4: #{tpu_custom_call.1} parent=0 // pred_region
    _
  $region5: #{tpu_custom_call.1} parent=0 // pred_fallthru
    _
  %v8 = vld [vmem:[%s0] sm:$0xff]
  %v9 = vld [vmem:[%s0 + $0x8] sm:$0x1]
  %v10 = vld [vmem:[%s0 + $0x10] sm:$0xff]
  %v11 = vld [vmem:[%s0 + $0x18] sm:$0x1]
  %v12 = vld [vmem:[%s0 + $0x20] sm:$0xff]
  %v13 = vld [vmem:[%s0 + $0x28] sm:$0x1]
  %v14 = vld [vmem:[%s0 + $0x30] sm:$0xff]
  %v15 = vld [vmem:[%s0 + $0x38] sm:$0x1]
  %v16 = vld [vmem:[%s0 + $0x40] sm:$0xff]
  %v17 = vld [vmem:[%s0 + $0x48] sm:$0x1]
  %v18 = vld [vmem:[%s0 + $0x50] sm:$0xff]
  %v19 = vld [vmem:[%s0 + $0x58] sm:$0x1]
  %v20 = vld [vmem:[%s0 + $0x60] sm:$0xff]
  %v21 = vld [vmem:[%s0 + $0x68] sm:$0x1]
  %v22 = vld [vmem:[%s0 + $0x70] sm:$0xff]
  %v23 = vld [vmem:[%s0 + $0x78] sm:$0x1]
  %v24 = vld [vmem:[%s0 + $0x80] sm:$0xff]
  %v25 = vld [vmem:[%s0 + $0x88] sm:$0x1]
  %v26 = vld [vmem:[%s0 + $0x90] sm:$0xff]
  %v27 = vld [vmem:[%s0 + $0x98] sm:$0x1]
  %v28 = vld [vmem:[%s0 + $0xa0] sm:$0xff]
  %v29 = vld [vmem:[%s0 + $0xa8] sm:$0x1]
  %v30 = vld [vmem:[%s0 + $0xb0] sm:$0xff]
  %v31 = vld [vmem:[%s0 + $0xb8] sm:$0x1]
  %v32 = vld [vmem:[%s0 + $0xc0] sm:$0xff]
  %v33 = vld [vmem:[%s0 + $0xc8] sm:$0x1]
  %v34 = vld [vmem:[%s0 + $0xd0] sm:$0xff]
  %v35 = vld [vmem:[%s0 + $0xd8] sm:$0x1]
  %v36 = vld [vmem:[%s0 + $0xe0] sm:$0xff]
  %v37 = vld [vmem:[%s0 + $0xe8] sm:$0x1]
  %v38 = vld [vmem:[%s0 + $0xf0] sm:$0xff]
  %v39 = vld [vmem:[%s0 + $0xf8] sm:$0x1]
  %v40 = vlaneseq
  %v41 = vshrl.u32 %v40, 7
  %v42 = vadd.s32 %v41, 8
  %v43 = vlaneseq
  %v44 = vand.u32 %v43, 127
  %vm45 = vcmp.lt.s32.totalorder %v44, 32
  %vm46 = vcmp.gt.s32.totalorder %v41, 0
  %vm47 = vcmp.gt.s32.totalorder %v42, 0
  %vm48 = vmand %vm46, %vm45
  %vm49 = vmand %vm47, %vm45
  %vm50 = vmxor %vm45, 1
  %vm51 = vmand %vm46, %vm50
  %vm52 = vmand %vm47, %vm50
  %v53 = vsel %vm51, 1, 0
  %v54 = vsel %vm52, 1, 0
  %vm55 = vcmp.eq.s32.totalorder %v53, 1
  %vm56 = vcmp.eq.s32.totalorder %v54, 1
  %v57 = vsel %vm55, %v8, 0.0
  %v58 = vsel %vm56, %v9, 0.0
  %v59 = vsel %vm55, %v10, 0.0
  %v60 = vsel %vm56, %v11, 0.0
  %v61 = vsel %vm55, %v12, 0.0
  %v62 = vsel %vm56, %v13, 0.0
  %v63 = vsel %vm55, %v14, 0.0
  %v64 = vsel %vm56, %v15, 0.0
  %v65 = vsel %vm55, %v16, 0.0
  %v66 = vsel %vm56, %v17, 0.0
  %v67 = vsel %vm55, %v18, 0.0
  %v68 = vsel %vm56, %v19, 0.0
  %v69 = vsel %vm55, %v20, 0.0
  %v70 = vsel %vm56, %v21, 0.0
  %v71 = vsel %vm55, %v22, 0.0
  %v72 = vsel %vm56, %v23, 0.0
  %v73 = vsel %vm55, %v24, 0.0
  %v74 = vsel %vm56, %v25, 0.0
  %v75 = vsel %vm55, %v26, 0.0
  %v76 = vsel %vm56, %v27, 0.0
  %v77 = vsel %vm55, %v28, 0.0
  %v78 = vsel %vm56, %v29, 0.0
  %v79 = vsel %vm55, %v30, 0.0
  %v80 = vsel %vm56, %v31, 0.0
  %v81 = vsel %vm55, %v32, 0.0
  %v82 = vsel %vm56, %v33, 0.0
  %v83 = vsel %vm55, %v34, 0.0
  %v84 = vsel %vm56, %v35, 0.0
  %v85 = vsel %vm55, %v36, 0.0
  %v86 = vsel %vm56, %v37, 0.0
  %v87 = vsel %vm55, %v38, 0.0
  %v88 = vsel %vm56, %v39, 0.0
  %vm89 = vcmask 293888
  %v91 = vsel %vm89, %v57, 0
  %v94 = vsel %vm89, %v58, 0
  %96 = vmatpush.xpose.msra.mxu0 0.0
  %97 = vmatpush.xpose.msra.mxu0 0.0
  %98 = vmatpush.xpose.msra.mxu0 0.0
  %99 = vmatpush.xpose.msra.mxu0 0.0
  %100 = vmatpush.xpose.msra.mxu0 0.0
  %101 = vmatpush.xpose.msra.mxu0 0.0
  %102 = vmatpush.xpose.msra.mxu0 0.0
  %103 = vmatpush.xpose.msra.mxu0 0.0
  %104 = vmatpush.xpose.msra.mxu0 0.0
  %105 = vmatpush.xpose.msra.mxu0 0.0
  %106 = vmatpush.xpose.msra.mxu0 0.0
  %107 = vmatpush.xpose.msra.mxu0 0.0
  %108 = vmatpush.xpose.msra.mxu0 0.0
  %109 = vmatpush.xpose.msra.mxu0 0.0
  %110 = vmatpush.xpose.msra.mxu0 %v94
  %111 = vmatpush.xpose.msra.mxu0 %v91
  %112 = vmatmul.f32.gmra.mxu0 %v91
  %v113 = vpop.f32.mrf.mxu0
  %v114 = vadd.f32 0.0, %v113
  %115 = vmatmul.f32.gmra.mxu0 %v94
  %v116 = vpop.f32.mrf.mxu0
  %v117 = vadd.f32 0.0, %v116
  %118 = vdwg.mxu0
  %v120 = vsel %vm89, %v59, 0
  %v123 = vsel %vm89, %v60, 0
  %125 = vmatpush.xpose.msra.mxu0 0.0
  %126 = vmatpush.xpose.msra.mxu0 0.0
  %127 = vmatpush.xpose.msra.mxu0 0.0
  %128 = vmatpush.xpose.msra.mxu0 0.0
  %129 = vmatpush.xpose.msra.mxu0 0.0
  %130 = vmatpush.xpose.msra.mxu0 0.0
  %131 = vmatpush.xpose.msra.mxu0 0.0
  %132 = vmatpush.xpose.msra.mxu0 0.0
  %133 = vmatpush.xpose.msra.mxu0 0.0
  %134 = vmatpush.xpose.msra.mxu0 0.0
  %135 = vmatpush.xpose.msra.mxu0 0.0
  %136 = vmatpush.xpose.msra.mxu0 0.0
  %137 = vmatpush.xpose.msra.mxu0 0.0
  %138 = vmatpush.xpose.msra.mxu0 0.0
  %139 = vmatpush.xpose.msra.mxu0 %v123
  %140 = vmatpush.xpose.msra.mxu0 %v120
  %141 = vmatmul.f32.gmra.mxu0 %v120
  %v142 = vpop.f32.mrf.mxu0
  %v143 = vadd.f32 0.0, %v142
  %144 = vmatmul.f32.gmra.mxu0 %v123
  %v145 = vpop.f32.mrf.mxu0
  %v146 = vadd.f32 0.0, %v145
  %147 = vdwg.mxu0
  %v149 = vsel %vm89, %v61, 0
  %v152 = vsel %vm89, %v62, 0
  %154 = vmatpush.xpose.msra.mxu0 0.0
  %155 = vmatpush.xpose.msra.mxu0 0.0
  %156 = vmatpush.xpose.msra.mxu0 0.0
  %157 = vmatpush.xpose.msra.mxu0 0.0
  %158 = vmatpush.xpose.msra.mxu0 0.0
  %159 = vmatpush.xpose.msra.mxu0 0.0
  %160 = vmatpush.xpose.msra.mxu0 0.0
  %161 = vmatpush.xpose.msra.mxu0 0.0
  %162 = vmatpush.xpose.msra.mxu0 0.0
  %163 = vmatpush.xpose.msra.mxu0 0.0
  %164 = vmatpush.xpose.msra.mxu0 0.0
  %165 = vmatpush.xpose.msra.mxu0 0.0
  %166 = vmatpush.xpose.msra.mxu0 0.0
  %167 = vmatpush.xpose.msra.mxu0 0.0
  %168 = vmatpush.xpose.msra.mxu0 %v152
  %169 = vmatpush.xpose.msra.mxu0 %v149
  %170 = vmatmul.f32.gmra.mxu0 %v149
  %v171 = vpop.f32.mrf.mxu0
  %v172 = vadd.f32 0.0, %v171
  %173 = vmatmul.f32.gmra.mxu0 %v152
  %v174 = vpop.f32.mrf.mxu0
  %v175 = vadd.f32 0.0, %v174
  %176 = vdwg.mxu0
  %v178 = vsel %vm89, %v63, 0
  %v181 = vsel %vm89, %v64, 0
  %183 = vmatpush.xpose.msra.mxu0 0.0
  %184 = vmatpush.xpose.msra.mxu0 0.0
  %185 = vmatpush.xpose.msra.mxu0 0.0
  %186 = vmatpush.xpose.msra.mxu0 0.0
  %187 = vmatpush.xpose.msra.mxu0 0.0
  %188 = vmatpush.xpose.msra.mxu0 0.0
  %189 = vmatpush.xpose.msra.mxu0 0.0
  %190 = vmatpush.xpose.msra.mxu0 0.0
  %191 = vmatpush.xpose.msra.mxu0 0.0
  %192 = vmatpush.xpose.msra.mxu0 0.0
  %193 = vmatpush.xpose.msra.mxu0 0.0
  %194 = vmatpush.xpose.msra.mxu0 0.0
  %195 = vmatpush.xpose.msra.mxu0 0.0
  %196 = vmatpush.xpose.msra.mxu0 0.0
  %197 = vmatpush.xpose.msra.mxu0 %v181
  %198 = vmatpush.xpose.msra.mxu0 %v178
  %199 = vmatmul.f32.gmra.mxu0 %v178
  %v200 = vpop.f32.mrf.mxu0
  %v201 = vadd.f32 0.0, %v200
  %202 = vmatmul.f32.gmra.mxu0 %v181
  %v203 = vpop.f32.mrf.mxu0
  %v204 = vadd.f32 0.0, %v203
  %205 = vdwg.mxu0
  %v207 = vsel %vm89, %v65, 0
  %v210 = vsel %vm89, %v66, 0
  %212 = vmatpush.xpose.msra.mxu0 0.0
  %213 = vmatpush.xpose.msra.mxu0 0.0
  %214 = vmatpush.xpose.msra.mxu0 0.0
  %215 = vmatpush.xpose.msra.mxu0 0.0
  %216 = vmatpush.xpose.msra.mxu0 0.0
  %217 = vmatpush.xpose.msra.mxu0 0.0
  %218 = vmatpush.xpose.msra.mxu0 0.0
  %219 = vmatpush.xpose.msra.mxu0 0.0
  %220 = vmatpush.xpose.msra.mxu0 0.0
  %221 = vmatpush.xpose.msra.mxu0 0.0
  %222 = vmatpush.xpose.msra.mxu0 0.0
  %223 = vmatpush.xpose.msra.mxu0 0.0
  %224 = vmatpush.xpose.msra.mxu0 0.0
  %225 = vmatpush.xpose.msra.mxu0 0.0
  %226 = vmatpush.xpose.msra.mxu0 %v210
  %227 = vmatpush.xpose.msra.mxu0 %v207
  %228 = vmatmul.f32.gmra.mxu0 %v207
  %v229 = vpop.f32.mrf.mxu0
  %v230 = vadd.f32 0.0, %v229
  %231 = vmatmul.f32.gmra.mxu0 %v210
  %v232 = vpop.f32.mrf.mxu0
  %v233 = vadd.f32 0.0, %v232
  %234 = vdwg.mxu0
  %v236 = vsel %vm89, %v67, 0
  %v239 = vsel %vm89, %v68, 0
  %241 = vmatpush.xpose.msra.mxu0 0.0
  %242 = vmatpush.xpose.msra.mxu0 0.0
  %243 = vmatpush.xpose.msra.mxu0 0.0
  %244 = vmatpush.xpose.msra.mxu0 0.0
  %245 = vmatpush.xpose.msra.mxu0 0.0
  %246 = vmatpush.xpose.msra.mxu0 0.0
  %247 = vmatpush.xpose.msra.mxu0 0.0
  %248 = vmatpush.xpose.msra.mxu0 0.0
  %249 = vmatpush.xpose.msra.mxu0 0.0
  %250 = vmatpush.xpose.msra.mxu0 0.0
  %251 = vmatpush.xpose.msra.mxu0 0.0
  %252 = vmatpush.xpose.msra.mxu0 0.0
  %253 = vmatpush.xpose.msra.mxu0 0.0
  %254 = vmatpush.xpose.msra.mxu0 0.0
  %255 = vmatpush.xpose.msra.mxu0 %v239
  %256 = vmatpush.xpose.msra.mxu0 %v236
  %257 = vmatmul.f32.gmra.mxu0 %v236
  %v258 = vpop.f32.mrf.mxu0
  %v259 = vadd.f32 0.0, %v258
  %260 = vmatmul.f32.gmra.mxu0 %v239
  %v261 = vpop.f32.mrf.mxu0
  %v262 = vadd.f32 0.0, %v261
  %263 = vdwg.mxu0
  %v265 = vsel %vm89, %v69, 0
  %v268 = vsel %vm89, %v70, 0
  %270 = vmatpush.xpose.msra.mxu0 0.0
  %271 = vmatpush.xpose.msra.mxu0 0.0
  %272 = vmatpush.xpose.msra.mxu0 0.0
  %273 = vmatpush.xpose.msra.mxu0 0.0
  %274 = vmatpush.xpose.msra.mxu0 0.0
  %275 = vmatpush.xpose.msra.mxu0 0.0
  %276 = vmatpush.xpose.msra.mxu0 0.0
  %277 = vmatpush.xpose.msra.mxu0 0.0
  %278 = vmatpush.xpose.msra.mxu0 0.0
  %279 = vmatpush.xpose.msra.mxu0 0.0
  %280 = vmatpush.xpose.msra.mxu0 0.0
  %281 = vmatpush.xpose.msra.mxu0 0.0
  %282 = vmatpush.xpose.msra.mxu0 0.0
  %283 = vmatpush.xpose.msra.mxu0 0.0
  %284 = vmatpush.xpose.msra.mxu0 %v268
  %285 = vmatpush.xpose.msra.mxu0 %v265
  %286 = vmatmul.f32.gmra.mxu0 %v265
  %v287 = vpop.f32.mrf.mxu0
  %v288 = vadd.f32 0.0, %v287
  %289 = vmatmul.f32.gmra.mxu0 %v268
  %v290 = vpop.f32.mrf.mxu0
  %v291 = vadd.f32 0.0, %v290
  %292 = vdwg.mxu0
  %v294 = vsel %vm89, %v71, 0
  %v297 = vsel %vm89, %v72, 0
  %299 = vmatpush.xpose.msra.mxu0 0.0
  %300 = vmatpush.xpose.msra.mxu0 0.0
  %301 = vmatpush.xpose.msra.mxu0 0.0
  %302 = vmatpush.xpose.msra.mxu0 0.0
  %303 = vmatpush.xpose.msra.mxu0 0.0
  %304 = vmatpush.xpose.msra.mxu0 0.0
  %305 = vmatpush.xpose.msra.mxu0 0.0
  %306 = vmatpush.xpose.msra.mxu0 0.0
  %307 = vmatpush.xpose.msra.mxu0 0.0
  %308 = vmatpush.xpose.msra.mxu0 0.0
  %309 = vmatpush.xpose.msra.mxu0 0.0
  %310 = vmatpush.xpose.msra.mxu0 0.0
  %311 = vmatpush.xpose.msra.mxu0 0.0
  %312 = vmatpush.xpose.msra.mxu0 0.0
  %313 = vmatpush.xpose.msra.mxu0 %v297
  %314 = vmatpush.xpose.msra.mxu0 %v294
  %315 = vmatmul.f32.gmra.mxu0 %v294
  %v316 = vpop.f32.mrf.mxu0
  %v317 = vadd.f32 0.0, %v316
  %318 = vmatmul.f32.gmra.mxu0 %v297
  %v319 = vpop.f32.mrf.mxu0
  %v320 = vadd.f32 0.0, %v319
  %321 = vdwg.mxu0
  %v323 = vsel %vm89, %v73, 0
  %v326 = vsel %vm89, %v74, 0
  %328 = vmatpush.xpose.msra.mxu0 0.0
  %329 = vmatpush.xpose.msra.mxu0 0.0
  %330 = vmatpush.xpose.msra.mxu0 0.0
  %331 = vmatpush.xpose.msra.mxu0 0.0
  %332 = vmatpush.xpose.msra.mxu0 0.0
  %333 = vmatpush.xpose.msra.mxu0 0.0
  %334 = vmatpush.xpose.msra.mxu0 0.0
  %335 = vmatpush.xpose.msra.mxu0 0.0
  %336 = vmatpush.xpose.msra.mxu0 0.0
  %337 = vmatpush.xpose.msra.mxu0 0.0
  %338 = vmatpush.xpose.msra.mxu0 0.0
  %339 = vmatpush.xpose.msra.mxu0 0.0
  %340 = vmatpush.xpose.msra.mxu0 0.0
  %341 = vmatpush.xpose.msra.mxu0 0.0
  %342 = vmatpush.xpose.msra.mxu0 %v326
  %343 = vmatpush.xpose.msra.mxu0 %v323
  %344 = vmatmul.f32.gmra.mxu0 %v323
  %v345 = vpop.f32.mrf.mxu0
  %v346 = vadd.f32 0.0, %v345
  %347 = vmatmul.f32.gmra.mxu0 %v326
  %v348 = vpop.f32.mrf.mxu0
  %v349 = vadd.f32 0.0, %v348
  %350 = vdwg.mxu0
  %v352 = vsel %vm89, %v75, 0
  %v355 = vsel %vm89, %v76, 0
  %357 = vmatpush.xpose.msra.mxu0 0.0
  %358 = vmatpush.xpose.msra.mxu0 0.0
  %359 = vmatpush.xpose.msra.mxu0 0.0
  %360 = vmatpush.xpose.msra.mxu0 0.0
  %361 = vmatpush.xpose.msra.mxu0 0.0
  %362 = vmatpush.xpose.msra.mxu0 0.0
  %363 = vmatpush.xpose.msra.mxu0 0.0
  %364 = vmatpush.xpose.msra.mxu0 0.0
  %365 = vmatpush.xpose.msra.mxu0 0.0
  %366 = vmatpush.xpose.msra.mxu0 0.0
  %367 = vmatpush.xpose.msra.mxu0 0.0
  %368 = vmatpush.xpose.msra.mxu0 0.0
  %369 = vmatpush.xpose.msra.mxu0 0.0
  %370 = vmatpush.xpose.msra.mxu0 0.0
  %371 = vmatpush.xpose.msra.mxu0 %v355
  %372 = vmatpush.xpose.msra.mxu0 %v352
  %373 = vmatmul.f32.gmra.mxu0 %v352
  %v374 = vpop.f32.mrf.mxu0
  %v375 = vadd.f32 0.0, %v374
  %376 = vmatmul.f32.gmra.mxu0 %v355
  %v377 = vpop.f32.mrf.mxu0
  %v378 = vadd.f32 0.0, %v377
  %379 = vdwg.mxu0
  %v381 = vsel %vm89, %v77, 0
  %v384 = vsel %vm89, %v78, 0
  %386 = vmatpush.xpose.msra.mxu0 0.0
  %387 = vmatpush.xpose.msra.mxu0 0.0
  %388 = vmatpush.xpose.msra.mxu0 0.0
  %389 = vmatpush.xpose.msra.mxu0 0.0
  %390 = vmatpush.xpose.msra.mxu0 0.0
  %391 = vmatpush.xpose.msra.mxu0 0.0
  %392 = vmatpush.xpose.msra.mxu0 0.0
  %393 = vmatpush.xpose.msra.mxu0 0.0
  %394 = vmatpush.xpose.msra.mxu0 0.0
  %395 = vmatpush.xpose.msra.mxu0 0.0
  %396 = vmatpush.xpose.msra.mxu0 0.0
  %397 = vmatpush.xpose.msra.mxu0 0.0
  %398 = vmatpush.xpose.msra.mxu0 0.0
  %399 = vmatpush.xpose.msra.mxu0 0.0
  %400 = vmatpush.xpose.msra.mxu0 %v384
  %401 = vmatpush.xpose.msra.mxu0 %v381
  %402 = vmatmul.f32.gmra.mxu0 %v381
  %v403 = vpop.f32.mrf.mxu0
  %v404 = vadd.f32 0.0, %v403
  %405 = vmatmul.f32.gmra.mxu0 %v384
  %v406 = vpop.f32.mrf.mxu0
  %v407 = vadd.f32 0.0, %v406
  %408 = vdwg.mxu0
  %v410 = vsel %vm89, %v79, 0
  %v413 = vsel %vm89, %v80, 0
  %415 = vmatpush.xpose.msra.mxu0 0.0
  %416 = vmatpush.xpose.msra.mxu0 0.0
  %417 = vmatpush.xpose.msra.mxu0 0.0
  %418 = vmatpush.xpose.msra.mxu0 0.0
  %419 = vmatpush.xpose.msra.mxu0 0.0
  %420 = vmatpush.xpose.msra.mxu0 0.0
  %421 = vmatpush.xpose.msra.mxu0 0.0
  %422 = vmatpush.xpose.msra.mxu0 0.0
  %423 = vmatpush.xpose.msra.mxu0 0.0
  %424 = vmatpush.xpose.msra.mxu0 0.0
  %425 = vmatpush.xpose.msra.mxu0 0.0
  %426 = vmatpush.xpose.msra.mxu0 0.0
  %427 = vmatpush.xpose.msra.mxu0 0.0
  %428 = vmatpush.xpose.msra.mxu0 0.0
  %429 = vmatpush.xpose.msra.mxu0 %v413
  %430 = vmatpush.xpose.msra.mxu0 %v410
  %431 = vmatmul.f32.gmra.mxu0 %v410
  %v432 = vpop.f32.mrf.mxu0
  %v433 = vadd.f32 0.0, %v432
  %434 = vmatmul.f32.gmra.mxu0 %v413
  %v435 = vpop.f32.mrf.mxu0
  %v436 = vadd.f32 0.0, %v435
  %437 = vdwg.mxu0
  %v439 = vsel %vm89, %v81, 0
  %v442 = vsel %vm89, %v82, 0
  %444 = vmatpush.xpose.msra.mxu0 0.0
  %445 = vmatpush.xpose.msra.mxu0 0.0
  %446 = vmatpush.xpose.msra.mxu0 0.0
  %447 = vmatpush.xpose.msra.mxu0 0.0
  %448 = vmatpush.xpose.msra.mxu0 0.0
  %449 = vmatpush.xpose.msra.mxu0 0.0
  %450 = vmatpush.xpose.msra.mxu0 0.0
  %451 = vmatpush.xpose.msra.mxu0 0.0
  %452 = vmatpush.xpose.msra.mxu0 0.0
  %453 = vmatpush.xpose.msra.mxu0 0.0
  %454 = vmatpush.xpose.msra.mxu0 0.0
  %455 = vmatpush.xpose.msra.mxu0 0.0
  %456 = vmatpush.xpose.msra.mxu0 0.0
  %457 = vmatpush.xpose.msra.mxu0 0.0
  %458 = vmatpush.xpose.msra.mxu0 %v442
  %459 = vmatpush.xpose.msra.mxu0 %v439
  %460 = vmatmul.f32.gmra.mxu0 %v439
  %v461 = vpop.f32.mrf.mxu0
  %v462 = vadd.f32 0.0, %v461
  %463 = vmatmul.f32.gmra.mxu0 %v442
  %v464 = vpop.f32.mrf.mxu0
  %v465 = vadd.f32 0.0, %v464
  %466 = vdwg.mxu0
  %v468 = vsel %vm89, %v83, 0
  %v471 = vsel %vm89, %v84, 0
  %473 = vmatpush.xpose.msra.mxu0 0.0
  %474 = vmatpush.xpose.msra.mxu0 0.0
  %475 = vmatpush.xpose.msra.mxu0 0.0
  %476 = vmatpush.xpose.msra.mxu0 0.0
  %477 = vmatpush.xpose.msra.mxu0 0.0
  %478 = vmatpush.xpose.msra.mxu0 0.0
  %479 = vmatpush.xpose.msra.mxu0 0.0
  %480 = vmatpush.xpose.msra.mxu0 0.0
  %481 = vmatpush.xpose.msra.mxu0 0.0
  %482 = vmatpush.xpose.msra.mxu0 0.0
  %483 = vmatpush.xpose.msra.mxu0 0.0
  %484 = vmatpush.xpose.msra.mxu0 0.0
  %485 = vmatpush.xpose.msra.mxu0 0.0
  %486 = vmatpush.xpose.msra.mxu0 0.0
  %487 = vmatpush.xpose.msra.mxu0 %v471
  %488 = vmatpush.xpose.msra.mxu0 %v468
  %489 = vmatmul.f32.gmra.mxu0 %v468
  %v490 = vpop.f32.mrf.mxu0
  %v491 = vadd.f32 0.0, %v490
  %492 = vmatmul.f32.gmra.mxu0 %v471
  %v493 = vpop.f32.mrf.mxu0
  %v494 = vadd.f32 0.0, %v493
  %495 = vdwg.mxu0
  %v497 = vsel %vm89, %v85, 0
  %v500 = vsel %vm89, %v86, 0
  %502 = vmatpush.xpose.msra.mxu0 0.0
  %503 = vmatpush.xpose.msra.mxu0 0.0
  %504 = vmatpush.xpose.msra.mxu0 0.0
  %505 = vmatpush.xpose.msra.mxu0 0.0
  %506 = vmatpush.xpose.msra.mxu0 0.0
  %507 = vmatpush.xpose.msra.mxu0 0.0
  %508 = vmatpush.xpose.msra.mxu0 0.0
  %509 = vmatpush.xpose.msra.mxu0 0.0
  %510 = vmatpush.xpose.msra.mxu0 0.0
  %511 = vmatpush.xpose.msra.mxu0 0.0
  %512 = vmatpush.xpose.msra.mxu0 0.0
  %513 = vmatpush.xpose.msra.mxu0 0.0
  %514 = vmatpush.xpose.msra.mxu0 0.0
  %515 = vmatpush.xpose.msra.mxu0 0.0
  %516 = vmatpush.xpose.msra.mxu0 %v500
  %517 = vmatpush.xpose.msra.mxu0 %v497
  %518 = vmatmul.f32.gmra.mxu0 %v497
  %v519 = vpop.f32.mrf.mxu0
  %v520 = vadd.f32 0.0, %v519
  %521 = vmatmul.f32.gmra.mxu0 %v500
  %v522 = vpop.f32.mrf.mxu0
  %v523 = vadd.f32 0.0, %v522
  %524 = vdwg.mxu0
  %v526 = vsel %vm89, %v87, 0
  %v529 = vsel %vm89, %v88, 0
  %531 = vmatpush.xpose.msra.mxu0 0.0
  %532 = vmatpush.xpose.msra.mxu0 0.0
  %533 = vmatpush.xpose.msra.mxu0 0.0
  %534 = vmatpush.xpose.msra.mxu0 0.0
  %535 = vmatpush.xpose.msra.mxu0 0.0
  %536 = vmatpush.xpose.msra.mxu0 0.0
  %537 = vmatpush.xpose.msra.mxu0 0.0
  %538 = vmatpush.xpose.msra.mxu0 0.0
  %539 = vmatpush.xpose.msra.mxu0 0.0
  %540 = vmatpush.xpose.msra.mxu0 0.0
  %541 = vmatpush.xpose.msra.mxu0 0.0
  %542 = vmatpush.xpose.msra.mxu0 0.0
  %543 = vmatpush.xpose.msra.mxu0 0.0
  %544 = vmatpush.xpose.msra.mxu0 0.0
  %545 = vmatpush.xpose.msra.mxu0 %v529
  %546 = vmatpush.xpose.msra.mxu0 %v526
  %547 = vmatmul.f32.gmra.mxu0 %v526
  %v548 = vpop.f32.mrf.mxu0
  %v549 = vadd.f32 0.0, %v548
  %550 = vmatmul.f32.gmra.mxu0 %v529
  %v551 = vpop.f32.mrf.mxu0
  %v552 = vadd.f32 0.0, %v551
  %553 = vdwg.mxu0
  %v554 = vmul.f32 %v114, 0.25
  %v555 = vmul.f32 %v117, 0.25
  %v556 = vmul.f32 %v143, 0.25
  %v557 = vmul.f32 %v146, 0.25
  %v558 = vmul.f32 %v172, 0.25
  %v559 = vmul.f32 %v175, 0.25
  %v560 = vmul.f32 %v201, 0.25
  %v561 = vmul.f32 %v204, 0.25
  %v562 = vmul.f32 %v230, 0.25
  %v563 = vmul.f32 %v233, 0.25
  %v564 = vmul.f32 %v259, 0.25
  %v565 = vmul.f32 %v262, 0.25
  %v566 = vmul.f32 %v288, 0.25
  %v567 = vmul.f32 %v291, 0.25
  %v568 = vmul.f32 %v317, 0.25
  %v569 = vmul.f32 %v320, 0.25
  %v570 = vmul.f32 %v346, 0.25
  %v571 = vmul.f32 %v349, 0.25
  %v572 = vmul.f32 %v375, 0.25
  %v573 = vmul.f32 %v378, 0.25
  %v574 = vmul.f32 %v404, 0.25
  %v575 = vmul.f32 %v407, 0.25
  %v576 = vmul.f32 %v433, 0.25
  %v577 = vmul.f32 %v436, 0.25
  %v578 = vmul.f32 %v462, 0.25
  %v579 = vmul.f32 %v465, 0.25
  %v580 = vmul.f32 %v491, 0.25
  %v581 = vmul.f32 %v494, 0.25
  %v582 = vmul.f32 %v520, 0.25
  %v583 = vmul.f32 %v523, 0.25
  %v584 = vmul.f32 %v549, 0.25
  %v585 = vmul.f32 %v552, 0.25
  %v586 = vmul.f32 %v8, 0.5
  %v587 = vmul.f32 %v9, 0.5
  %v588 = vmul.f32 %v10, 0.5
  %v589 = vmul.f32 %v11, 0.5
  %v590 = vmul.f32 %v12, 0.5
  %v591 = vmul.f32 %v13, 0.5
  %v592 = vmul.f32 %v14, 0.5
  %v593 = vmul.f32 %v15, 0.5
  %v594 = vmul.f32 %v16, 0.5
  %v595 = vmul.f32 %v17, 0.5
  %v596 = vmul.f32 %v18, 0.5
  %v597 = vmul.f32 %v19, 0.5
  %v598 = vmul.f32 %v20, 0.5
  %v599 = vmul.f32 %v21, 0.5
  %v600 = vmul.f32 %v22, 0.5
  %v601 = vmul.f32 %v23, 0.5
  %v602 = vmul.f32 %v24, 0.5
  %v603 = vmul.f32 %v25, 0.5
  %v604 = vmul.f32 %v26, 0.5
  %v605 = vmul.f32 %v27, 0.5
  %v606 = vmul.f32 %v28, 0.5
  %v607 = vmul.f32 %v29, 0.5
  %v608 = vmul.f32 %v30, 0.5
  %v609 = vmul.f32 %v31, 0.5
  %v610 = vmul.f32 %v32, 0.5
  %v611 = vmul.f32 %v33, 0.5
  %v612 = vmul.f32 %v34, 0.5
  %v613 = vmul.f32 %v35, 0.5
  %v614 = vmul.f32 %v36, 0.5
  %v615 = vmul.f32 %v37, 0.5
  %v616 = vmul.f32 %v38, 0.5
  %v617 = vmul.f32 %v39, 0.5
  %619 = vset.pattern.permute.xlu0 1
  %620 = vperm.xlu0 %619, %v554
  %v621 = vpop.permute.xlu0 %620
  %624 = vset.pattern.permute.xlu0 1
  %625 = vperm.xlu0 %624, %v555
  %v626 = vpop.permute.xlu0 %625
  %629 = vset.pattern.permute.xlu0 1
  %630 = vperm.xlu0 %629, %v556
  %v631 = vpop.permute.xlu0 %630
  %634 = vset.pattern.permute.xlu0 1
  %635 = vperm.xlu0 %634, %v557
  %v636 = vpop.permute.xlu0 %635
  %639 = vset.pattern.permute.xlu0 1
  %640 = vperm.xlu0 %639, %v558
  %v641 = vpop.permute.xlu0 %640
  %644 = vset.pattern.permute.xlu0 1
  %645 = vperm.xlu0 %644, %v559
  %v646 = vpop.permute.xlu0 %645
  %649 = vset.pattern.permute.xlu0 1
  %650 = vperm.xlu0 %649, %v560
  %v651 = vpop.permute.xlu0 %650
  %654 = vset.pattern.permute.xlu0 1
  %655 = vperm.xlu0 %654, %v561
  %v656 = vpop.permute.xlu0 %655
  %659 = vset.pattern.permute.xlu0 1
  %660 = vperm.xlu0 %659, %v562
  %v661 = vpop.permute.xlu0 %660
  %664 = vset.pattern.permute.xlu0 1
  %665 = vperm.xlu0 %664, %v563
  %v666 = vpop.permute.xlu0 %665
  %669 = vset.pattern.permute.xlu0 1
  %670 = vperm.xlu0 %669, %v564
  %v671 = vpop.permute.xlu0 %670
  %674 = vset.pattern.permute.xlu0 1
  %675 = vperm.xlu0 %674, %v565
  %v676 = vpop.permute.xlu0 %675
  %679 = vset.pattern.permute.xlu0 1
  %680 = vperm.xlu0 %679, %v566
  %v681 = vpop.permute.xlu0 %680
  %684 = vset.pattern.permute.xlu0 1
  %685 = vperm.xlu0 %684, %v567
  %v686 = vpop.permute.xlu0 %685
  %689 = vset.pattern.permute.xlu0 1
  %690 = vperm.xlu0 %689, %v568
  %v691 = vpop.permute.xlu0 %690
  %694 = vset.pattern.permute.xlu0 1
  %695 = vperm.xlu0 %694, %v569
  %v696 = vpop.permute.xlu0 %695
  %699 = vset.pattern.permute.xlu0 1
  %700 = vperm.xlu0 %699, %v570
  %v701 = vpop.permute.xlu0 %700
  %704 = vset.pattern.permute.xlu0 1
  %705 = vperm.xlu0 %704, %v571
  %v706 = vpop.permute.xlu0 %705
  %709 = vset.pattern.permute.xlu0 1
  %710 = vperm.xlu0 %709, %v572
  %v711 = vpop.permute.xlu0 %710
  %714 = vset.pattern.permute.xlu0 1
  %715 = vperm.xlu0 %714, %v573
  %v716 = vpop.permute.xlu0 %715
  %719 = vset.pattern.permute.xlu0 1
  %720 = vperm.xlu0 %719, %v574
  %v721 = vpop.permute.xlu0 %720
  %724 = vset.pattern.permute.xlu0 1
  %725 = vperm.xlu0 %724, %v575
  %v726 = vpop.permute.xlu0 %725
  %729 = vset.pattern.permute.xlu0 1
  %730 = vperm.xlu0 %729, %v576
  %v731 = vpop.permute.xlu0 %730
  %734 = vset.pattern.permute.xlu0 1
  %735 = vperm.xlu0 %734, %v577
  %v736 = vpop.permute.xlu0 %735
  %739 = vset.pattern.permute.xlu0 1
  %740 = vperm.xlu0 %739, %v578
  %v741 = vpop.permute.xlu0 %740
  %744 = vset.pattern.permute.xlu0 1
  %745 = vperm.xlu0 %744, %v579
  %v746 = vpop.permute.xlu0 %745
  %749 = vset.pattern.permute.xlu0 1
  %750 = vperm.xlu0 %749, %v580
  %v751 = vpop.permute.xlu0 %750
  %754 = vset.pattern.permute.xlu0 1
  %755 = vperm.xlu0 %754, %v581
  %v756 = vpop.permute.xlu0 %755
  %759 = vset.pattern.permute.xlu0 1
  %760 = vperm.xlu0 %759, %v582
  %v761 = vpop.permute.xlu0 %760
  %764 = vset.pattern.permute.xlu0 1
  %765 = vperm.xlu0 %764, %v583
  %v766 = vpop.permute.xlu0 %765
  %769 = vset.pattern.permute.xlu0 1
  %770 = vperm.xlu0 %769, %v584
  %v771 = vpop.permute.xlu0 %770
  %774 = vset.pattern.permute.xlu0 1
  %775 = vperm.xlu0 %774, %v585
  %v776 = vpop.permute.xlu0 %775
  %v778 = vperm.slane %v8, 1
  %v779 = vperm.slane %v10, 1
  %v780 = vperm.slane %v12, 1
  %v781 = vperm.slane %v14, 1
  %v782 = vperm.slane %v16, 1
  %v783 = vperm.slane %v18, 1
  %v784 = vperm.slane %v20, 1
  %v785 = vperm.slane %v22, 1
  %v786 = vperm.slane %v24, 1
  %v787 = vperm.slane %v26, 1
  %v788 = vperm.slane %v28, 1
  %v789 = vperm.slane %v30, 1
  %v790 = vperm.slane %v32, 1
  %v791 = vperm.slane %v34, 1
  %v792 = vperm.slane %v36, 1
  %v793 = vperm.slane %v38, 1
  %v794 = vmul.f32 %v621, %v778
  %v795 = vmul.f32 %v626, %v778
  %v796 = vmul.f32 %v631, %v779
  %v797 = vmul.f32 %v636, %v779
  %v798 = vmul.f32 %v641, %v780
  %v799 = vmul.f32 %v646, %v780
  %v800 = vmul.f32 %v651, %v781
  %v801 = vmul.f32 %v656, %v781
  %v802 = vmul.f32 %v661, %v782
  %v803 = vmul.f32 %v666, %v782
  %v804 = vmul.f32 %v671, %v783
  %v805 = vmul.f32 %v676, %v783
  %v806 = vmul.f32 %v681, %v784
  %v807 = vmul.f32 %v686, %v784
  %v808 = vmul.f32 %v691, %v785
  %v809 = vmul.f32 %v696, %v785
  %v810 = vmul.f32 %v701, %v786
  %v811 = vmul.f32 %v706, %v786
  %v812 = vmul.f32 %v711, %v787
  %v813 = vmul.f32 %v716, %v787
  %v814 = vmul.f32 %v721, %v788
  %v815 = vmul.f32 %v726, %v788
  %v816 = vmul.f32 %v731, %v789
  %v817 = vmul.f32 %v736, %v789
  %v818 = vmul.f32 %v741, %v790
  %v819 = vmul.f32 %v746, %v790
  %v820 = vmul.f32 %v751, %v791
  %v821 = vmul.f32 %v756, %v791
  %v822 = vmul.f32 %v761, %v792
  %v823 = vmul.f32 %v766, %v792
  %v824 = vmul.f32 %v771, %v793
  %v825 = vmul.f32 %v776, %v793
  %v826 = vadd.f32 %v586, %v794
  %v827 = vadd.f32 %v587, %v795
  %v828 = vadd.f32 %v588, %v796
  %v829 = vadd.f32 %v589, %v797
  %v830 = vadd.f32 %v590, %v798
  %v831 = vadd.f32 %v591, %v799
  %v832 = vadd.f32 %v592, %v800
  %v833 = vadd.f32 %v593, %v801
  %v834 = vadd.f32 %v594, %v802
  %v835 = vadd.f32 %v595, %v803
  %v836 = vadd.f32 %v596, %v804
  %v837 = vadd.f32 %v597, %v805
  %v838 = vadd.f32 %v598, %v806
  %v839 = vadd.f32 %v599, %v807
  %v840 = vadd.f32 %v600, %v808
  %v841 = vadd.f32 %v601, %v809
  %v842 = vadd.f32 %v602, %v810
  %v843 = vadd.f32 %v603, %v811
  %v844 = vadd.f32 %v604, %v812
  %v845 = vadd.f32 %v605, %v813
  %v846 = vadd.f32 %v606, %v814
  %v847 = vadd.f32 %v607, %v815
  %v848 = vadd.f32 %v608, %v816
  %v849 = vadd.f32 %v609, %v817
  %v850 = vadd.f32 %v610, %v818
  %v851 = vadd.f32 %v611, %v819
  %v852 = vadd.f32 %v612, %v820
  %v853 = vadd.f32 %v613, %v821
  %v854 = vadd.f32 %v614, %v822
  %v855 = vadd.f32 %v615, %v823
  %v856 = vadd.f32 %v616, %v824
  %v857 = vadd.f32 %v617, %v825
  %858 = vset.pattern.permute.xlu0 2
  %859 = vperm.xlu0 %858, %v554
  %v860 = vpop.permute.xlu0 %859
  %862 = vset.pattern.permute.xlu0 2
  %863 = vperm.xlu0 %862, %v555
  %v864 = vpop.permute.xlu0 %863
  %866 = vset.pattern.permute.xlu0 2
  %867 = vperm.xlu0 %866, %v556
  %v868 = vpop.permute.xlu0 %867
  %870 = vset.pattern.permute.xlu0 2
  %871 = vperm.xlu0 %870, %v557
  %v872 = vpop.permute.xlu0 %871
  %874 = vset.pattern.permute.xlu0 2
  %875 = vperm.xlu0 %874, %v558
  %v876 = vpop.permute.xlu0 %875
  %878 = vset.pattern.permute.xlu0 2
  %879 = vperm.xlu0 %878, %v559
  %v880 = vpop.permute.xlu0 %879
  %882 = vset.pattern.permute.xlu0 2
  %883 = vperm.xlu0 %882, %v560
  %v884 = vpop.permute.xlu0 %883
  %886 = vset.pattern.permute.xlu0 2
  %887 = vperm.xlu0 %886, %v561
  %v888 = vpop.permute.xlu0 %887
  %890 = vset.pattern.permute.xlu0 2
  %891 = vperm.xlu0 %890, %v562
  %v892 = vpop.permute.xlu0 %891
  %894 = vset.pattern.permute.xlu0 2
  %895 = vperm.xlu0 %894, %v563
  %v896 = vpop.permute.xlu0 %895
  %898 = vset.pattern.permute.xlu0 2
  %899 = vperm.xlu0 %898, %v564
  %v900 = vpop.permute.xlu0 %899
  %902 = vset.pattern.permute.xlu0 2
  %903 = vperm.xlu0 %902, %v565
  %v904 = vpop.permute.xlu0 %903
  %906 = vset.pattern.permute.xlu0 2
  %907 = vperm.xlu0 %906, %v566
  %v908 = vpop.permute.xlu0 %907
  %910 = vset.pattern.permute.xlu0 2
  %911 = vperm.xlu0 %910, %v567
  %v912 = vpop.permute.xlu0 %911
  %914 = vset.pattern.permute.xlu0 2
  %915 = vperm.xlu0 %914, %v568
  %v916 = vpop.permute.xlu0 %915
  %918 = vset.pattern.permute.xlu0 2
  %919 = vperm.xlu0 %918, %v569
  %v920 = vpop.permute.xlu0 %919
  %922 = vset.pattern.permute.xlu0 2
  %923 = vperm.xlu0 %922, %v570
  %v924 = vpop.permute.xlu0 %923
  %926 = vset.pattern.permute.xlu0 2
  %927 = vperm.xlu0 %926, %v571
  %v928 = vpop.permute.xlu0 %927
  %930 = vset.pattern.permute.xlu0 2
  %931 = vperm.xlu0 %930, %v572
  %v932 = vpop.permute.xlu0 %931
  %934 = vset.pattern.permute.xlu0 2
  %935 = vperm.xlu0 %934, %v573
  %v936 = vpop.permute.xlu0 %935
  %938 = vset.pattern.permute.xlu0 2
  %939 = vperm.xlu0 %938, %v574
  %v940 = vpop.permute.xlu0 %939
  %942 = vset.pattern.permute.xlu0 2
  %943 = vperm.xlu0 %942, %v575
  %v944 = vpop.permute.xlu0 %943
  %946 = vset.pattern.permute.xlu0 2
  %947 = vperm.xlu0 %946, %v576
  %v948 = vpop.permute.xlu0 %947
  %950 = vset.pattern.permute.xlu0 2
  %951 = vperm.xlu0 %950, %v577
  %v952 = vpop.permute.xlu0 %951
  %954 = vset.pattern.permute.xlu0 2
  %955 = vperm.xlu0 %954, %v578
  %v956 = vpop.permute.xlu0 %955
  %958 = vset.pattern.permute.xlu0 2
  %959 = vperm.xlu0 %958, %v579
  %v960 = vpop.permute.xlu0 %959
  %962 = vset.pattern.permute.xlu0 2
  %963 = vperm.xlu0 %962, %v580
  %v964 = vpop.permute.xlu0 %963
  %966 = vset.pattern.permute.xlu0 2
  %967 = vperm.xlu0 %966, %v581
  %v968 = vpop.permute.xlu0 %967
  %970 = vset.pattern.permute.xlu0 2
  %971 = vperm.xlu0 %970, %v582
  %v972 = vpop.permute.xlu0 %971
  %974 = vset.pattern.permute.xlu0 2
  %975 = vperm.xlu0 %974, %v583
  %v976 = vpop.permute.xlu0 %975
  %978 = vset.pattern.permute.xlu0 2
  %979 = vperm.xlu0 %978, %v584
  %v980 = vpop.permute.xlu0 %979
  %982 = vset.pattern.permute.xlu0 2
  %983 = vperm.xlu0 %982, %v585
  %v984 = vpop.permute.xlu0 %983
  %v986 = vperm.slane %v8, 2
  %v987 = vperm.slane %v10, 2
  %v988 = vperm.slane %v12, 2
  %v989 = vperm.slane %v14, 2
  %v990 = vperm.slane %v16, 2
  %v991 = vperm.slane %v18, 2
  %v992 = vperm.slane %v20, 2
  %v993 = vperm.slane %v22, 2
  %v994 = vperm.slane %v24, 2
  %v995 = vperm.slane %v26, 2
  %v996 = vperm.slane %v28, 2
  %v997 = vperm.slane %v30, 2
  %v998 = vperm.slane %v32, 2
  %v999 = vperm.slane %v34, 2
  %v1000 = vperm.slane %v36, 2
  %v1001 = vperm.slane %v38, 2
  %v1002 = vmul.f32 %v860, %v986
  %v1003 = vmul.f32 %v864, %v986
  %v1004 = vmul.f32 %v868, %v987
  %v1005 = vmul.f32 %v872, %v987
  %v1006 = vmul.f32 %v876, %v988
  %v1007 = vmul.f32 %v880, %v988
  %v1008 = vmul.f32 %v884, %v989
  %v1009 = vmul.f32 %v888, %v989
  %v1010 = vmul.f32 %v892, %v990
  %v1011 = vmul.f32 %v896, %v990
  %v1012 = vmul.f32 %v900, %v991
  %v1013 = vmul.f32 %v904, %v991
  %v1014 = vmul.f32 %v908, %v992
  %v1015 = vmul.f32 %v912, %v992
  %v1016 = vmul.f32 %v916, %v993
  %v1017 = vmul.f32 %v920, %v993
  %v1018 = vmul.f32 %v924, %v994
  %v1019 = vmul.f32 %v928, %v994
  %v1020 = vmul.f32 %v932, %v995
  %v1021 = vmul.f32 %v936, %v995
  %v1022 = vmul.f32 %v940, %v996
  %v1023 = vmul.f32 %v944, %v996
  %v1024 = vmul.f32 %v948, %v997
  %v1025 = vmul.f32 %v952, %v997
  %v1026 = vmul.f32 %v956, %v998
  %v1027 = vmul.f32 %v960, %v998
  %v1028 = vmul.f32 %v964, %v999
  %v1029 = vmul.f32 %v968, %v999
  %v1030 = vmul.f32 %v972, %v1000
  %v1031 = vmul.f32 %v976, %v1000
  %v1032 = vmul.f32 %v980, %v1001
  %v1033 = vmul.f32 %v984, %v1001
  %v1034 = vadd.f32 %v826, %v1002
  %v1035 = vadd.f32 %v827, %v1003
  %v1036 = vadd.f32 %v828, %v1004
  %v1037 = vadd.f32 %v829, %v1005
  %v1038 = vadd.f32 %v830, %v1006
  %v1039 = vadd.f32 %v831, %v1007
  %v1040 = vadd.f32 %v832, %v1008
  %v1041 = vadd.f32 %v833, %v1009
  %v1042 = vadd.f32 %v834, %v1010
  %v1043 = vadd.f32 %v835, %v1011
  %v1044 = vadd.f32 %v836, %v1012
  %v1045 = vadd.f32 %v837, %v1013
  %v1046 = vadd.f32 %v838, %v1014
  %v1047 = vadd.f32 %v839, %v1015
  %v1048 = vadd.f32 %v840, %v1016
  %v1049 = vadd.f32 %v841, %v1017
  %v1050 = vadd.f32 %v842, %v1018
  %v1051 = vadd.f32 %v843, %v1019
  %v1052 = vadd.f32 %v844, %v1020
  %v1053 = vadd.f32 %v845, %v1021
  %v1054 = vadd.f32 %v846, %v1022
  %v1055 = vadd.f32 %v847, %v1023
  %v1056 = vadd.f32 %v848, %v1024
  %v1057 = vadd.f32 %v849, %v1025
  %v1058 = vadd.f32 %v850, %v1026
  %v1059 = vadd.f32 %v851, %v1027
  %v1060 = vadd.f32 %v852, %v1028
  %v1061 = vadd.f32 %v853, %v1029
  %v1062 = vadd.f32 %v854, %v1030
  %v1063 = vadd.f32 %v855, %v1031
  %v1064 = vadd.f32 %v856, %v1032
  %v1065 = vadd.f32 %v857, %v1033
  %1066 = vset.pattern.permute.xlu0 3
  %1067 = vperm.xlu0 %1066, %v554
  %v1068 = vpop.permute.xlu0 %1067
  %1070 = vset.pattern.permute.xlu0 3
  %1071 = vperm.xlu0 %1070, %v555
  %v1072 = vpop.permute.xlu0 %1071
  %1074 = vset.pattern.permute.xlu0 3
  %1075 = vperm.xlu0 %1074, %v556
  %v1076 = vpop.permute.xlu0 %1075
  %1078 = vset.pattern.permute.xlu0 3
  %1079 = vperm.xlu0 %1078, %v557
  %v1080 = vpop.permute.xlu0 %1079
  %1082 = vset.pattern.permute.xlu0 3
  %1083 = vperm.xlu0 %1082, %v558
  %v1084 = vpop.permute.xlu0 %1083
  %1086 = vset.pattern.permute.xlu0 3
  %1087 = vperm.xlu0 %1086, %v559
  %v1088 = vpop.permute.xlu0 %1087
  %1090 = vset.pattern.permute.xlu0 3
  %1091 = vperm.xlu0 %1090, %v560
  %v1092 = vpop.permute.xlu0 %1091
  %1094 = vset.pattern.permute.xlu0 3
  %1095 = vperm.xlu0 %1094, %v561
  %v1096 = vpop.permute.xlu0 %1095
  %1098 = vset.pattern.permute.xlu0 3
  %1099 = vperm.xlu0 %1098, %v562
  %v1100 = vpop.permute.xlu0 %1099
  %1102 = vset.pattern.permute.xlu0 3
  %1103 = vperm.xlu0 %1102, %v563
  %v1104 = vpop.permute.xlu0 %1103
  %1106 = vset.pattern.permute.xlu0 3
  %1107 = vperm.xlu0 %1106, %v564
  %v1108 = vpop.permute.xlu0 %1107
  %1110 = vset.pattern.permute.xlu0 3
  %1111 = vperm.xlu0 %1110, %v565
  %v1112 = vpop.permute.xlu0 %1111
  %1114 = vset.pattern.permute.xlu0 3
  %1115 = vperm.xlu0 %1114, %v566
  %v1116 = vpop.permute.xlu0 %1115
  %1118 = vset.pattern.permute.xlu0 3
  %1119 = vperm.xlu0 %1118, %v567
  %v1120 = vpop.permute.xlu0 %1119
  %1122 = vset.pattern.permute.xlu0 3
  %1123 = vperm.xlu0 %1122, %v568
  %v1124 = vpop.permute.xlu0 %1123
  %1126 = vset.pattern.permute.xlu0 3
  %1127 = vperm.xlu0 %1126, %v569
  %v1128 = vpop.permute.xlu0 %1127
  %1130 = vset.pattern.permute.xlu0 3
  %1131 = vperm.xlu0 %1130, %v570
  %v1132 = vpop.permute.xlu0 %1131
  %1134 = vset.pattern.permute.xlu0 3
  %1135 = vperm.xlu0 %1134, %v571
  %v1136 = vpop.permute.xlu0 %1135
  %1138 = vset.pattern.permute.xlu0 3
  %1139 = vperm.xlu0 %1138, %v572
  %v1140 = vpop.permute.xlu0 %1139
  %1142 = vset.pattern.permute.xlu0 3
  %1143 = vperm.xlu0 %1142, %v573
  %v1144 = vpop.permute.xlu0 %1143
  %1146 = vset.pattern.permute.xlu0 3
  %1147 = vperm.xlu0 %1146, %v574
  %v1148 = vpop.permute.xlu0 %1147
  %1150 = vset.pattern.permute.xlu0 3
  %1151 = vperm.xlu0 %1150, %v575
  %v1152 = vpop.permute.xlu0 %1151
  %1154 = vset.pattern.permute.xlu0 3
  %1155 = vperm.xlu0 %1154, %v576
  %v1156 = vpop.permute.xlu0 %1155
  %1158 = vset.pattern.permute.xlu0 3
  %1159 = vperm.xlu0 %1158, %v577
  %v1160 = vpop.permute.xlu0 %1159
  %1162 = vset.pattern.permute.xlu0 3
  %1163 = vperm.xlu0 %1162, %v578
  %v1164 = vpop.permute.xlu0 %1163
  %1166 = vset.pattern.permute.xlu0 3
  %1167 = vperm.xlu0 %1166, %v579
  %v1168 = vpop.permute.xlu0 %1167
  %1170 = vset.pattern.permute.xlu0 3
  %1171 = vperm.xlu0 %1170, %v580
  %v1172 = vpop.permute.xlu0 %1171
  %1174 = vset.pattern.permute.xlu0 3
  %1175 = vperm.xlu0 %1174, %v581
  %v1176 = vpop.permute.xlu0 %1175
  %1178 = vset.pattern.permute.xlu0 3
  %1179 = vperm.xlu0 %1178, %v582
  %v1180 = vpop.permute.xlu0 %1179
  %1182 = vset.pattern.permute.xlu0 3
  %1183 = vperm.xlu0 %1182, %v583
  %v1184 = vpop.permute.xlu0 %1183
  %1186 = vset.pattern.permute.xlu0 3
  %1187 = vperm.xlu0 %1186, %v584
  %v1188 = vpop.permute.xlu0 %1187
  %1190 = vset.pattern.permute.xlu0 3
  %1191 = vperm.xlu0 %1190, %v585
  %v1192 = vpop.permute.xlu0 %1191
  %v1194 = vperm.slane %v8, 3
  %v1195 = vperm.slane %v10, 3
  %v1196 = vperm.slane %v12, 3
  %v1197 = vperm.slane %v14, 3
  %v1198 = vperm.slane %v16, 3
  %v1199 = vperm.slane %v18, 3
  %v1200 = vperm.slane %v20, 3
  %v1201 = vperm.slane %v22, 3
  %v1202 = vperm.slane %v24, 3
  %v1203 = vperm.slane %v26, 3
  %v1204 = vperm.slane %v28, 3
  %v1205 = vperm.slane %v30, 3
  %v1206 = vperm.slane %v32, 3
  %v1207 = vperm.slane %v34, 3
  %v1208 = vperm.slane %v36, 3
  %v1209 = vperm.slane %v38, 3
  %v1210 = vmul.f32 %v1068, %v1194
  %v1211 = vmul.f32 %v1072, %v1194
  %v1212 = vmul.f32 %v1076, %v1195
  %v1213 = vmul.f32 %v1080, %v1195
  %v1214 = vmul.f32 %v1084, %v1196
  %v1215 = vmul.f32 %v1088, %v1196
  %v1216 = vmul.f32 %v1092, %v1197
  %v1217 = vmul.f32 %v1096, %v1197
  %v1218 = vmul.f32 %v1100, %v1198
  %v1219 = vmul.f32 %v1104, %v1198
  %v1220 = vmul.f32 %v1108, %v1199
  %v1221 = vmul.f32 %v1112, %v1199
  %v1222 = vmul.f32 %v1116, %v1200
  %v1223 = vmul.f32 %v1120, %v1200
  %v1224 = vmul.f32 %v1124, %v1201
  %v1225 = vmul.f32 %v1128, %v1201
  %v1226 = vmul.f32 %v1132, %v1202
  %v1227 = vmul.f32 %v1136, %v1202
  %v1228 = vmul.f32 %v1140, %v1203
  %v1229 = vmul.f32 %v1144, %v1203
  %v1230 = vmul.f32 %v1148, %v1204
  %v1231 = vmul.f32 %v1152, %v1204
  %v1232 = vmul.f32 %v1156, %v1205
  %v1233 = vmul.f32 %v1160, %v1205
  %v1234 = vmul.f32 %v1164, %v1206
  %v1235 = vmul.f32 %v1168, %v1206
  %v1236 = vmul.f32 %v1172, %v1207
  %v1237 = vmul.f32 %v1176, %v1207
  %v1238 = vmul.f32 %v1180, %v1208
  %v1239 = vmul.f32 %v1184, %v1208
  %v1240 = vmul.f32 %v1188, %v1209
  %v1241 = vmul.f32 %v1192, %v1209
  %v1242 = vadd.f32 %v1034, %v1210
  %v1243 = vadd.f32 %v1035, %v1211
  %v1244 = vadd.f32 %v1036, %v1212
  %v1245 = vadd.f32 %v1037, %v1213
  %v1246 = vadd.f32 %v1038, %v1214
  %v1247 = vadd.f32 %v1039, %v1215
  %v1248 = vadd.f32 %v1040, %v1216
  %v1249 = vadd.f32 %v1041, %v1217
  %v1250 = vadd.f32 %v1042, %v1218
  %v1251 = vadd.f32 %v1043, %v1219
  %v1252 = vadd.f32 %v1044, %v1220
  %v1253 = vadd.f32 %v1045, %v1221
  %v1254 = vadd.f32 %v1046, %v1222
  %v1255 = vadd.f32 %v1047, %v1223
  %v1256 = vadd.f32 %v1048, %v1224
  %v1257 = vadd.f32 %v1049, %v1225
  %v1258 = vadd.f32 %v1050, %v1226
  %v1259 = vadd.f32 %v1051, %v1227
  %v1260 = vadd.f32 %v1052, %v1228
  %v1261 = vadd.f32 %v1053, %v1229
  %v1262 = vadd.f32 %v1054, %v1230
  %v1263 = vadd.f32 %v1055, %v1231
  %v1264 = vadd.f32 %v1056, %v1232
  %v1265 = vadd.f32 %v1057, %v1233
  %v1266 = vadd.f32 %v1058, %v1234
  %v1267 = vadd.f32 %v1059, %v1235
  %v1268 = vadd.f32 %v1060, %v1236
  %v1269 = vadd.f32 %v1061, %v1237
  %v1270 = vadd.f32 %v1062, %v1238
  %v1271 = vadd.f32 %v1063, %v1239
  %v1272 = vadd.f32 %v1064, %v1240
  %v1273 = vadd.f32 %v1065, %v1241
  %1274 = vset.pattern.permute.xlu0 4
  %1275 = vperm.xlu0 %1274, %v554
  %v1276 = vpop.permute.xlu0 %1275
  %1278 = vset.pattern.permute.xlu0 4
  %1279 = vperm.xlu0 %1278, %v555
  %v1280 = vpop.permute.xlu0 %1279
  %1282 = vset.pattern.permute.xlu0 4
  %1283 = vperm.xlu0 %1282, %v556
  %v1284 = vpop.permute.xlu0 %1283
  %1286 = vset.pattern.permute.xlu0 4
  %1287 = vperm.xlu0 %1286, %v557
  %v1288 = vpop.permute.xlu0 %1287
  %1290 = vset.pattern.permute.xlu0 4
  %1291 = vperm.xlu0 %1290, %v558
  %v1292 = vpop.permute.xlu0 %1291
  %1294 = vset.pattern.permute.xlu0 4
  %1295 = vperm.xlu0 %1294, %v559
  %v1296 = vpop.permute.xlu0 %1295
  %1298 = vset.pattern.permute.xlu0 4
  %1299 = vperm.xlu0 %1298, %v560
  %v1300 = vpop.permute.xlu0 %1299
  %1302 = vset.pattern.permute.xlu0 4
  %1303 = vperm.xlu0 %1302, %v561
  %v1304 = vpop.permute.xlu0 %1303
  %1306 = vset.pattern.permute.xlu0 4
  %1307 = vperm.xlu0 %1306, %v562
  %v1308 = vpop.permute.xlu0 %1307
  %1310 = vset.pattern.permute.xlu0 4
  %1311 = vperm.xlu0 %1310, %v563
  %v1312 = vpop.permute.xlu0 %1311
  %1314 = vset.pattern.permute.xlu0 4
  %1315 = vperm.xlu0 %1314, %v564
  %v1316 = vpop.permute.xlu0 %1315
  %1318 = vset.pattern.permute.xlu0 4
  %1319 = vperm.xlu0 %1318, %v565
  %v1320 = vpop.permute.xlu0 %1319
  %1322 = vset.pattern.permute.xlu0 4
  %1323 = vperm.xlu0 %1322, %v566
  %v1324 = vpop.permute.xlu0 %1323
  %1326 = vset.pattern.permute.xlu0 4
  %1327 = vperm.xlu0 %1326, %v567
  %v1328 = vpop.permute.xlu0 %1327
  %1330 = vset.pattern.permute.xlu0 4
  %1331 = vperm.xlu0 %1330, %v568
  %v1332 = vpop.permute.xlu0 %1331
  %1334 = vset.pattern.permute.xlu0 4
  %1335 = vperm.xlu0 %1334, %v569
  %v1336 = vpop.permute.xlu0 %1335
  %1338 = vset.pattern.permute.xlu0 4
  %1339 = vperm.xlu0 %1338, %v570
  %v1340 = vpop.permute.xlu0 %1339
  %1342 = vset.pattern.permute.xlu0 4
  %1343 = vperm.xlu0 %1342, %v571
  %v1344 = vpop.permute.xlu0 %1343
  %1346 = vset.pattern.permute.xlu0 4
  %1347 = vperm.xlu0 %1346, %v572
  %v1348 = vpop.permute.xlu0 %1347
  %1350 = vset.pattern.permute.xlu0 4
  %1351 = vperm.xlu0 %1350, %v573
  %v1352 = vpop.permute.xlu0 %1351
  %1354 = vset.pattern.permute.xlu0 4
  %1355 = vperm.xlu0 %1354, %v574
  %v1356 = vpop.permute.xlu0 %1355
  %1358 = vset.pattern.permute.xlu0 4
  %1359 = vperm.xlu0 %1358, %v575
  %v1360 = vpop.permute.xlu0 %1359
  %1362 = vset.pattern.permute.xlu0 4
  %1363 = vperm.xlu0 %1362, %v576
  %v1364 = vpop.permute.xlu0 %1363
  %1366 = vset.pattern.permute.xlu0 4
  %1367 = vperm.xlu0 %1366, %v577
  %v1368 = vpop.permute.xlu0 %1367
  %1370 = vset.pattern.permute.xlu0 4
  %1371 = vperm.xlu0 %1370, %v578
  %v1372 = vpop.permute.xlu0 %1371
  %1374 = vset.pattern.permute.xlu0 4
  %1375 = vperm.xlu0 %1374, %v579
  %v1376 = vpop.permute.xlu0 %1375
  %1378 = vset.pattern.permute.xlu0 4
  %1379 = vperm.xlu0 %1378, %v580
  %v1380 = vpop.permute.xlu0 %1379
  %1382 = vset.pattern.permute.xlu0 4
  %1383 = vperm.xlu0 %1382, %v581
  %v1384 = vpop.permute.xlu0 %1383
  %1386 = vset.pattern.permute.xlu0 4
  %1387 = vperm.xlu0 %1386, %v582
  %v1388 = vpop.permute.xlu0 %1387
  %1390 = vset.pattern.permute.xlu0 4
  %1391 = vperm.xlu0 %1390, %v583
  %v1392 = vpop.permute.xlu0 %1391
  %1394 = vset.pattern.permute.xlu0 4
  %1395 = vperm.xlu0 %1394, %v584
  %v1396 = vpop.permute.xlu0 %1395
  %1398 = vset.pattern.permute.xlu0 4
  %1399 = vperm.xlu0 %1398, %v585
  %v1400 = vpop.permute.xlu0 %1399
  %v1402 = vperm.slane %v8, 4
  %v1403 = vperm.slane %v10, 4
  %v1404 = vperm.slane %v12, 4
  %v1405 = vperm.slane %v14, 4
  %v1406 = vperm.slane %v16, 4
  %v1407 = vperm.slane %v18, 4
  %v1408 = vperm.slane %v20, 4
  %v1409 = vperm.slane %v22, 4
  %v1410 = vperm.slane %v24, 4
  %v1411 = vperm.slane %v26, 4
  %v1412 = vperm.slane %v28, 4
  %v1413 = vperm.slane %v30, 4
  %v1414 = vperm.slane %v32, 4
  %v1415 = vperm.slane %v34, 4
  %v1416 = vperm.slane %v36, 4
  %v1417 = vperm.slane %v38, 4
  %v1418 = vmul.f32 %v1276, %v1402
  %v1419 = vmul.f32 %v1280, %v1402
  %v1420 = vmul.f32 %v1284, %v1403
  %v1421 = vmul.f32 %v1288, %v1403
  %v1422 = vmul.f32 %v1292, %v1404
  %v1423 = vmul.f32 %v1296, %v1404
  %v1424 = vmul.f32 %v1300, %v1405
  %v1425 = vmul.f32 %v1304, %v1405
  %v1426 = vmul.f32 %v1308, %v1406
  %v1427 = vmul.f32 %v1312, %v1406
  %v1428 = vmul.f32 %v1316, %v1407
  %v1429 = vmul.f32 %v1320, %v1407
  %v1430 = vmul.f32 %v1324, %v1408
  %v1431 = vmul.f32 %v1328, %v1408
  %v1432 = vmul.f32 %v1332, %v1409
  %v1433 = vmul.f32 %v1336, %v1409
  %v1434 = vmul.f32 %v1340, %v1410
  %v1435 = vmul.f32 %v1344, %v1410
  %v1436 = vmul.f32 %v1348, %v1411
  %v1437 = vmul.f32 %v1352, %v1411
  %v1438 = vmul.f32 %v1356, %v1412
  %v1439 = vmul.f32 %v1360, %v1412
  %v1440 = vmul.f32 %v1364, %v1413
  %v1441 = vmul.f32 %v1368, %v1413
  %v1442 = vmul.f32 %v1372, %v1414
  %v1443 = vmul.f32 %v1376, %v1414
  %v1444 = vmul.f32 %v1380, %v1415
  %v1445 = vmul.f32 %v1384, %v1415
  %v1446 = vmul.f32 %v1388, %v1416
  %v1447 = vmul.f32 %v1392, %v1416
  %v1448 = vmul.f32 %v1396, %v1417
  %v1449 = vmul.f32 %v1400, %v1417
  %v1450 = vadd.f32 %v1242, %v1418
  %v1451 = vadd.f32 %v1243, %v1419
  %v1452 = vadd.f32 %v1244, %v1420
  %v1453 = vadd.f32 %v1245, %v1421
  %v1454 = vadd.f32 %v1246, %v1422
  %v1455 = vadd.f32 %v1247, %v1423
  %v1456 = vadd.f32 %v1248, %v1424
  %v1457 = vadd.f32 %v1249, %v1425
  %v1458 = vadd.f32 %v1250, %v1426
  %v1459 = vadd.f32 %v1251, %v1427
  %v1460 = vadd.f32 %v1252, %v1428
  %v1461 = vadd.f32 %v1253, %v1429
  %v1462 = vadd.f32 %v1254, %v1430
  %v1463 = vadd.f32 %v1255, %v1431
  %v1464 = vadd.f32 %v1256, %v1432
  %v1465 = vadd.f32 %v1257, %v1433
  %v1466 = vadd.f32 %v1258, %v1434
  %v1467 = vadd.f32 %v1259, %v1435
  %v1468 = vadd.f32 %v1260, %v1436
  %v1469 = vadd.f32 %v1261, %v1437
  %v1470 = vadd.f32 %v1262, %v1438
  %v1471 = vadd.f32 %v1263, %v1439
  %v1472 = vadd.f32 %v1264, %v1440
  %v1473 = vadd.f32 %v1265, %v1441
  %v1474 = vadd.f32 %v1266, %v1442
  %v1475 = vadd.f32 %v1267, %v1443
  %v1476 = vadd.f32 %v1268, %v1444
  %v1477 = vadd.f32 %v1269, %v1445
  %v1478 = vadd.f32 %v1270, %v1446
  %v1479 = vadd.f32 %v1271, %v1447
  %v1480 = vadd.f32 %v1272, %v1448
  %v1481 = vadd.f32 %v1273, %v1449
  %1482 = vset.pattern.permute.xlu0 5
  %1483 = vperm.xlu0 %1482, %v554
  %v1484 = vpop.permute.xlu0 %1483
  %1486 = vset.pattern.permute.xlu0 5
  %1487 = vperm.xlu0 %1486, %v555
  %v1488 = vpop.permute.xlu0 %1487
  %1490 = vset.pattern.permute.xlu0 5
  %1491 = vperm.xlu0 %1490, %v556
  %v1492 = vpop.permute.xlu0 %1491
  %1494 = vset.pattern.permute.xlu0 5
  %1495 = vperm.xlu0 %1494, %v557
  %v1496 = vpop.permute.xlu0 %1495
  %1498 = vset.pattern.permute.xlu0 5
  %1499 = vperm.xlu0 %1498, %v558
  %v1500 = vpop.permute.xlu0 %1499
  %1502 = vset.pattern.permute.xlu0 5
  %1503 = vperm.xlu0 %1502, %v559
  %v1504 = vpop.permute.xlu0 %1503
  %1506 = vset.pattern.permute.xlu0 5
  %1507 = vperm.xlu0 %1506, %v560
  %v1508 = vpop.permute.xlu0 %1507
  %1510 = vset.pattern.permute.xlu0 5
  %1511 = vperm.xlu0 %1510, %v561
  %v1512 = vpop.permute.xlu0 %1511
  %1514 = vset.pattern.permute.xlu0 5
  %1515 = vperm.xlu0 %1514, %v562
  %v1516 = vpop.permute.xlu0 %1515
  %1518 = vset.pattern.permute.xlu0 5
  %1519 = vperm.xlu0 %1518, %v563
  %v1520 = vpop.permute.xlu0 %1519
  %1522 = vset.pattern.permute.xlu0 5
  %1523 = vperm.xlu0 %1522, %v564
  %v1524 = vpop.permute.xlu0 %1523
  %1526 = vset.pattern.permute.xlu0 5
  %1527 = vperm.xlu0 %1526, %v565
  %v1528 = vpop.permute.xlu0 %1527
  %1530 = vset.pattern.permute.xlu0 5
  %1531 = vperm.xlu0 %1530, %v566
  %v1532 = vpop.permute.xlu0 %1531
  %1534 = vset.pattern.permute.xlu0 5
  %1535 = vperm.xlu0 %1534, %v567
  %v1536 = vpop.permute.xlu0 %1535
  %1538 = vset.pattern.permute.xlu0 5
  %1539 = vperm.xlu0 %1538, %v568
  %v1540 = vpop.permute.xlu0 %1539
  %1542 = vset.pattern.permute.xlu0 5
  %1543 = vperm.xlu0 %1542, %v569
  %v1544 = vpop.permute.xlu0 %1543
  %1546 = vset.pattern.permute.xlu0 5
  %1547 = vperm.xlu0 %1546, %v570
  %v1548 = vpop.permute.xlu0 %1547
  %1550 = vset.pattern.permute.xlu0 5
  %1551 = vperm.xlu0 %1550, %v571
  %v1552 = vpop.permute.xlu0 %1551
  %1554 = vset.pattern.permute.xlu0 5
  %1555 = vperm.xlu0 %1554, %v572
  %v1556 = vpop.permute.xlu0 %1555
  %1558 = vset.pattern.permute.xlu0 5
  %1559 = vperm.xlu0 %1558, %v573
  %v1560 = vpop.permute.xlu0 %1559
  %1562 = vset.pattern.permute.xlu0 5
  %1563 = vperm.xlu0 %1562, %v574
  %v1564 = vpop.permute.xlu0 %1563
  %1566 = vset.pattern.permute.xlu0 5
  %1567 = vperm.xlu0 %1566, %v575
  %v1568 = vpop.permute.xlu0 %1567
  %1570 = vset.pattern.permute.xlu0 5
  %1571 = vperm.xlu0 %1570, %v576
  %v1572 = vpop.permute.xlu0 %1571
  %1574 = vset.pattern.permute.xlu0 5
  %1575 = vperm.xlu0 %1574, %v577
  %v1576 = vpop.permute.xlu0 %1575
  %1578 = vset.pattern.permute.xlu0 5
  %1579 = vperm.xlu0 %1578, %v578
  %v1580 = vpop.permute.xlu0 %1579
  %1582 = vset.pattern.permute.xlu0 5
  %1583 = vperm.xlu0 %1582, %v579
  %v1584 = vpop.permute.xlu0 %1583
  %1586 = vset.pattern.permute.xlu0 5
  %1587 = vperm.xlu0 %1586, %v580
  %v1588 = vpop.permute.xlu0 %1587
  %1590 = vset.pattern.permute.xlu0 5
  %1591 = vperm.xlu0 %1590, %v581
  %v1592 = vpop.permute.xlu0 %1591
  %1594 = vset.pattern.permute.xlu0 5
  %1595 = vperm.xlu0 %1594, %v582
  %v1596 = vpop.permute.xlu0 %1595
  %1598 = vset.pattern.permute.xlu0 5
  %1599 = vperm.xlu0 %1598, %v583
  %v1600 = vpop.permute.xlu0 %1599
  %1602 = vset.pattern.permute.xlu0 5
  %1603 = vperm.xlu0 %1602, %v584
  %v1604 = vpop.permute.xlu0 %1603
  %1606 = vset.pattern.permute.xlu0 5
  %1607 = vperm.xlu0 %1606, %v585
  %v1608 = vpop.permute.xlu0 %1607
  %v1610 = vperm.slane %v8, 5
  %v1611 = vperm.slane %v10, 5
  %v1612 = vperm.slane %v12, 5
  %v1613 = vperm.slane %v14, 5
  %v1614 = vperm.slane %v16, 5
  %v1615 = vperm.slane %v18, 5
  %v1616 = vperm.slane %v20, 5
  %v1617 = vperm.slane %v22, 5
  %v1618 = vperm.slane %v24, 5
  %v1619 = vperm.slane %v26, 5
  %v1620 = vperm.slane %v28, 5
  %v1621 = vperm.slane %v30, 5
  %v1622 = vperm.slane %v32, 5
  %v1623 = vperm.slane %v34, 5
  %v1624 = vperm.slane %v36, 5
  %v1625 = vperm.slane %v38, 5
  %v1626 = vmul.f32 %v1484, %v1610
  %v1627 = vmul.f32 %v1488, %v1610
  %v1628 = vmul.f32 %v1492, %v1611
  %v1629 = vmul.f32 %v1496, %v1611
  %v1630 = vmul.f32 %v1500, %v1612
  %v1631 = vmul.f32 %v1504, %v1612
  %v1632 = vmul.f32 %v1508, %v1613
  %v1633 = vmul.f32 %v1512, %v1613
  %v1634 = vmul.f32 %v1516, %v1614
  %v1635 = vmul.f32 %v1520, %v1614
  %v1636 = vmul.f32 %v1524, %v1615
  %v1637 = vmul.f32 %v1528, %v1615
  %v1638 = vmul.f32 %v1532, %v1616
  %v1639 = vmul.f32 %v1536, %v1616
  %v1640 = vmul.f32 %v1540, %v1617
  %v1641 = vmul.f32 %v1544, %v1617
  %v1642 = vmul.f32 %v1548, %v1618
  %v1643 = vmul.f32 %v1552, %v1618
  %v1644 = vmul.f32 %v1556, %v1619
  %v1645 = vmul.f32 %v1560, %v1619
  %v1646 = vmul.f32 %v1564, %v1620
  %v1647 = vmul.f32 %v1568, %v1620
  %v1648 = vmul.f32 %v1572, %v1621
  %v1649 = vmul.f32 %v1576, %v1621
  %v1650 = vmul.f32 %v1580, %v1622
  %v1651 = vmul.f32 %v1584, %v1622
  %v1652 = vmul.f32 %v1588, %v1623
  %v1653 = vmul.f32 %v1592, %v1623
  %v1654 = vmul.f32 %v1596, %v1624
  %v1655 = vmul.f32 %v1600, %v1624
  %v1656 = vmul.f32 %v1604, %v1625
  %v1657 = vmul.f32 %v1608, %v1625
  %v1658 = vadd.f32 %v1450, %v1626
  %v1659 = vadd.f32 %v1451, %v1627
  %v1660 = vadd.f32 %v1452, %v1628
  %v1661 = vadd.f32 %v1453, %v1629
  %v1662 = vadd.f32 %v1454, %v1630
  %v1663 = vadd.f32 %v1455, %v1631
  %v1664 = vadd.f32 %v1456, %v1632
  %v1665 = vadd.f32 %v1457, %v1633
  %v1666 = vadd.f32 %v1458, %v1634
  %v1667 = vadd.f32 %v1459, %v1635
  %v1668 = vadd.f32 %v1460, %v1636
  %v1669 = vadd.f32 %v1461, %v1637
  %v1670 = vadd.f32 %v1462, %v1638
  %v1671 = vadd.f32 %v1463, %v1639
  %v1672 = vadd.f32 %v1464, %v1640
  %v1673 = vadd.f32 %v1465, %v1641
  %v1674 = vadd.f32 %v1466, %v1642
  %v1675 = vadd.f32 %v1467, %v1643
  %v1676 = vadd.f32 %v1468, %v1644
  %v1677 = vadd.f32 %v1469, %v1645
  %v1678 = vadd.f32 %v1470, %v1646
  %v1679 = vadd.f32 %v1471, %v1647
  %v1680 = vadd.f32 %v1472, %v1648
  %v1681 = vadd.f32 %v1473, %v1649
  %v1682 = vadd.f32 %v1474, %v1650
  %v1683 = vadd.f32 %v1475, %v1651
  %v1684 = vadd.f32 %v1476, %v1652
  %v1685 = vadd.f32 %v1477, %v1653
  %v1686 = vadd.f32 %v1478, %v1654
  %v1687 = vadd.f32 %v1479, %v1655
  %v1688 = vadd.f32 %v1480, %v1656
  %v1689 = vadd.f32 %v1481, %v1657
  %1690 = vset.pattern.permute.xlu0 6
  %1691 = vperm.xlu0 %1690, %v554
  %v1692 = vpop.permute.xlu0 %1691
  %1694 = vset.pattern.permute.xlu0 6
  %1695 = vperm.xlu0 %1694, %v555
  %v1696 = vpop.permute.xlu0 %1695
  %1698 = vset.pattern.permute.xlu0 6
  %1699 = vperm.xlu0 %1698, %v556
  %v1700 = vpop.permute.xlu0 %1699
  %1702 = vset.pattern.permute.xlu0 6
  %1703 = vperm.xlu0 %1702, %v557
  %v1704 = vpop.permute.xlu0 %1703
  %1706 = vset.pattern.permute.xlu0 6
  %1707 = vperm.xlu0 %1706, %v558
  %v1708 = vpop.permute.xlu0 %1707
  %1710 = vset.pattern.permute.xlu0 6
  %1711 = vperm.xlu0 %1710, %v559
  %v1712 = vpop.permute.xlu0 %1711
  %1714 = vset.pattern.permute.xlu0 6
  %1715 = vperm.xlu0 %1714, %v560
  %v1716 = vpop.permute.xlu0 %1715
  %1718 = vset.pattern.permute.xlu0 6
  %1719 = vperm.xlu0 %1718, %v561
  %v1720 = vpop.permute.xlu0 %1719
  %1722 = vset.pattern.permute.xlu0 6
  %1723 = vperm.xlu0 %1722, %v562
  %v1724 = vpop.permute.xlu0 %1723
  %1726 = vset.pattern.permute.xlu0 6
  %1727 = vperm.xlu0 %1726, %v563
  %v1728 = vpop.permute.xlu0 %1727
  %1730 = vset.pattern.permute.xlu0 6
  %1731 = vperm.xlu0 %1730, %v564
  %v1732 = vpop.permute.xlu0 %1731
  %1734 = vset.pattern.permute.xlu0 6
  %1735 = vperm.xlu0 %1734, %v565
  %v1736 = vpop.permute.xlu0 %1735
  %1738 = vset.pattern.permute.xlu0 6
  %1739 = vperm.xlu0 %1738, %v566
  %v1740 = vpop.permute.xlu0 %1739
  %1742 = vset.pattern.permute.xlu0 6
  %1743 = vperm.xlu0 %1742, %v567
  %v1744 = vpop.permute.xlu0 %1743
  %1746 = vset.pattern.permute.xlu0 6
  %1747 = vperm.xlu0 %1746, %v568
  %v1748 = vpop.permute.xlu0 %1747
  %1750 = vset.pattern.permute.xlu0 6
  %1751 = vperm.xlu0 %1750, %v569
  %v1752 = vpop.permute.xlu0 %1751
  %1754 = vset.pattern.permute.xlu0 6
  %1755 = vperm.xlu0 %1754, %v570
  %v1756 = vpop.permute.xlu0 %1755
  %1758 = vset.pattern.permute.xlu0 6
  %1759 = vperm.xlu0 %1758, %v571
  %v1760 = vpop.permute.xlu0 %1759
  %1762 = vset.pattern.permute.xlu0 6
  %1763 = vperm.xlu0 %1762, %v572
  %v1764 = vpop.permute.xlu0 %1763
  %1766 = vset.pattern.permute.xlu0 6
  %1767 = vperm.xlu0 %1766, %v573
  %v1768 = vpop.permute.xlu0 %1767
  %1770 = vset.pattern.permute.xlu0 6
  %1771 = vperm.xlu0 %1770, %v574
  %v1772 = vpop.permute.xlu0 %1771
  %1774 = vset.pattern.permute.xlu0 6
  %1775 = vperm.xlu0 %1774, %v575
  %v1776 = vpop.permute.xlu0 %1775
  %1778 = vset.pattern.permute.xlu0 6
  %1779 = vperm.xlu0 %1778, %v576
  %v1780 = vpop.permute.xlu0 %1779
  %1782 = vset.pattern.permute.xlu0 6
  %1783 = vperm.xlu0 %1782, %v577
  %v1784 = vpop.permute.xlu0 %1783
  %1786 = vset.pattern.permute.xlu0 6
  %1787 = vperm.xlu0 %1786, %v578
  %v1788 = vpop.permute.xlu0 %1787
  %1790 = vset.pattern.permute.xlu0 6
  %1791 = vperm.xlu0 %1790, %v579
  %v1792 = vpop.permute.xlu0 %1791
  %1794 = vset.pattern.permute.xlu0 6
  %1795 = vperm.xlu0 %1794, %v580
  %v1796 = vpop.permute.xlu0 %1795
  %1798 = vset.pattern.permute.xlu0 6
  %1799 = vperm.xlu0 %1798, %v581
  %v1800 = vpop.permute.xlu0 %1799
  %1802 = vset.pattern.permute.xlu0 6
  %1803 = vperm.xlu0 %1802, %v582
  %v1804 = vpop.permute.xlu0 %1803
  %1806 = vset.pattern.permute.xlu0 6
  %1807 = vperm.xlu0 %1806, %v583
  %v1808 = vpop.permute.xlu0 %1807
  %1810 = vset.pattern.permute.xlu0 6
  %1811 = vperm.xlu0 %1810, %v584
  %v1812 = vpop.permute.xlu0 %1811
  %1814 = vset.pattern.permute.xlu0 6
  %1815 = vperm.xlu0 %1814, %v585
  %v1816 = vpop.permute.xlu0 %1815
  %v1818 = vperm.slane %v8, 6
  %v1819 = vperm.slane %v10, 6
  %v1820 = vperm.slane %v12, 6
  %v1821 = vperm.slane %v14, 6
  %v1822 = vperm.slane %v16, 6
  %v1823 = vperm.slane %v18, 6
  %v1824 = vperm.slane %v20, 6
  %v1825 = vperm.slane %v22, 6
  %v1826 = vperm.slane %v24, 6
  %v1827 = vperm.slane %v26, 6
  %v1828 = vperm.slane %v28, 6
  %v1829 = vperm.slane %v30, 6
  %v1830 = vperm.slane %v32, 6
  %v1831 = vperm.slane %v34, 6
  %v1832 = vperm.slane %v36, 6
  %v1833 = vperm.slane %v38, 6
  %v1834 = vmul.f32 %v1692, %v1818
  %v1835 = vmul.f32 %v1696, %v1818
  %v1836 = vmul.f32 %v1700, %v1819
  %v1837 = vmul.f32 %v1704, %v1819
  %v1838 = vmul.f32 %v1708, %v1820
  %v1839 = vmul.f32 %v1712, %v1820
  %v1840 = vmul.f32 %v1716, %v1821
  %v1841 = vmul.f32 %v1720, %v1821
  %v1842 = vmul.f32 %v1724, %v1822
  %v1843 = vmul.f32 %v1728, %v1822
  %v1844 = vmul.f32 %v1732, %v1823
  %v1845 = vmul.f32 %v1736, %v1823
  %v1846 = vmul.f32 %v1740, %v1824
  %v1847 = vmul.f32 %v1744, %v1824
  %v1848 = vmul.f32 %v1748, %v1825
  %v1849 = vmul.f32 %v1752, %v1825
  %v1850 = vmul.f32 %v1756, %v1826
  %v1851 = vmul.f32 %v1760, %v1826
  %v1852 = vmul.f32 %v1764, %v1827
  %v1853 = vmul.f32 %v1768, %v1827
  %v1854 = vmul.f32 %v1772, %v1828
  %v1855 = vmul.f32 %v1776, %v1828
  %v1856 = vmul.f32 %v1780, %v1829
  %v1857 = vmul.f32 %v1784, %v1829
  %v1858 = vmul.f32 %v1788, %v1830
  %v1859 = vmul.f32 %v1792, %v1830
  %v1860 = vmul.f32 %v1796, %v1831
  %v1861 = vmul.f32 %v1800, %v1831
  %v1862 = vmul.f32 %v1804, %v1832
  %v1863 = vmul.f32 %v1808, %v1832
  %v1864 = vmul.f32 %v1812, %v1833
  %v1865 = vmul.f32 %v1816, %v1833
  %v1866 = vadd.f32 %v1658, %v1834
  %v1867 = vadd.f32 %v1659, %v1835
  %v1868 = vadd.f32 %v1660, %v1836
  %v1869 = vadd.f32 %v1661, %v1837
  %v1870 = vadd.f32 %v1662, %v1838
  %v1871 = vadd.f32 %v1663, %v1839
  %v1872 = vadd.f32 %v1664, %v1840
  %v1873 = vadd.f32 %v1665, %v1841
  %v1874 = vadd.f32 %v1666, %v1842
  %v1875 = vadd.f32 %v1667, %v1843
  %v1876 = vadd.f32 %v1668, %v1844
  %v1877 = vadd.f32 %v1669, %v1845
  %v1878 = vadd.f32 %v1670, %v1846
  %v1879 = vadd.f32 %v1671, %v1847
  %v1880 = vadd.f32 %v1672, %v1848
  %v1881 = vadd.f32 %v1673, %v1849
  %v1882 = vadd.f32 %v1674, %v1850
  %v1883 = vadd.f32 %v1675, %v1851
  %v1884 = vadd.f32 %v1676, %v1852
  %v1885 = vadd.f32 %v1677, %v1853
  %v1886 = vadd.f32 %v1678, %v1854
  %v1887 = vadd.f32 %v1679, %v1855
  %v1888 = vadd.f32 %v1680, %v1856
  %v1889 = vadd.f32 %v1681, %v1857
  %v1890 = vadd.f32 %v1682, %v1858
  %v1891 = vadd.f32 %v1683, %v1859
  %v1892 = vadd.f32 %v1684, %v1860
  %v1893 = vadd.f32 %v1685, %v1861
  %v1894 = vadd.f32 %v1686, %v1862
  %v1895 = vadd.f32 %v1687, %v1863
  %v1896 = vadd.f32 %v1688, %v1864
  %v1897 = vadd.f32 %v1689, %v1865
  %1898 = vset.pattern.permute.xlu0 7
  %1899 = vperm.xlu0 %1898, %v554
  %v1900 = vpop.permute.xlu0 %1899
  %1902 = vset.pattern.permute.xlu0 7
  %1903 = vperm.xlu0 %1902, %v555
  %v1904 = vpop.permute.xlu0 %1903
  %1906 = vset.pattern.permute.xlu0 7
  %1907 = vperm.xlu0 %1906, %v556
  %v1908 = vpop.permute.xlu0 %1907
  %1910 = vset.pattern.permute.xlu0 7
  %1911 = vperm.xlu0 %1910, %v557
  %v1912 = vpop.permute.xlu0 %1911
  %1914 = vset.pattern.permute.xlu0 7
  %1915 = vperm.xlu0 %1914, %v558
  %v1916 = vpop.permute.xlu0 %1915
  %1918 = vset.pattern.permute.xlu0 7
  %1919 = vperm.xlu0 %1918, %v559
  %v1920 = vpop.permute.xlu0 %1919
  %1922 = vset.pattern.permute.xlu0 7
  %1923 = vperm.xlu0 %1922, %v560
  %v1924 = vpop.permute.xlu0 %1923
  %1926 = vset.pattern.permute.xlu0 7
  %1927 = vperm.xlu0 %1926, %v561
  %v1928 = vpop.permute.xlu0 %1927
  %1930 = vset.pattern.permute.xlu0 7
  %1931 = vperm.xlu0 %1930, %v562
  %v1932 = vpop.permute.xlu0 %1931
  %1934 = vset.pattern.permute.xlu0 7
  %1935 = vperm.xlu0 %1934, %v563
  %v1936 = vpop.permute.xlu0 %1935
  %1938 = vset.pattern.permute.xlu0 7
  %1939 = vperm.xlu0 %1938, %v564
  %v1940 = vpop.permute.xlu0 %1939
  %1942 = vset.pattern.permute.xlu0 7
  %1943 = vperm.xlu0 %1942, %v565
  %v1944 = vpop.permute.xlu0 %1943
  %1946 = vset.pattern.permute.xlu0 7
  %1947 = vperm.xlu0 %1946, %v566
  %v1948 = vpop.permute.xlu0 %1947
  %1950 = vset.pattern.permute.xlu0 7
  %1951 = vperm.xlu0 %1950, %v567
  %v1952 = vpop.permute.xlu0 %1951
  %1954 = vset.pattern.permute.xlu0 7
  %1955 = vperm.xlu0 %1954, %v568
  %v1956 = vpop.permute.xlu0 %1955
  %1958 = vset.pattern.permute.xlu0 7
  %1959 = vperm.xlu0 %1958, %v569
  %v1960 = vpop.permute.xlu0 %1959
  %1962 = vset.pattern.permute.xlu0 7
  %1963 = vperm.xlu0 %1962, %v570
  %v1964 = vpop.permute.xlu0 %1963
  %1966 = vset.pattern.permute.xlu0 7
  %1967 = vperm.xlu0 %1966, %v571
  %v1968 = vpop.permute.xlu0 %1967
  %1970 = vset.pattern.permute.xlu0 7
  %1971 = vperm.xlu0 %1970, %v572
  %v1972 = vpop.permute.xlu0 %1971
  %1974 = vset.pattern.permute.xlu0 7
  %1975 = vperm.xlu0 %1974, %v573
  %v1976 = vpop.permute.xlu0 %1975
  %1978 = vset.pattern.permute.xlu0 7
  %1979 = vperm.xlu0 %1978, %v574
  %v1980 = vpop.permute.xlu0 %1979
  %1982 = vset.pattern.permute.xlu0 7
  %1983 = vperm.xlu0 %1982, %v575
  %v1984 = vpop.permute.xlu0 %1983
  %1986 = vset.pattern.permute.xlu0 7
  %1987 = vperm.xlu0 %1986, %v576
  %v1988 = vpop.permute.xlu0 %1987
  %1990 = vset.pattern.permute.xlu0 7
  %1991 = vperm.xlu0 %1990, %v577
  %v1992 = vpop.permute.xlu0 %1991
  %1994 = vset.pattern.permute.xlu0 7
  %1995 = vperm.xlu0 %1994, %v578
  %v1996 = vpop.permute.xlu0 %1995
  %1998 = vset.pattern.permute.xlu0 7
  %1999 = vperm.xlu0 %1998, %v579
  %v2000 = vpop.permute.xlu0 %1999
  %2002 = vset.pattern.permute.xlu0 7
  %2003 = vperm.xlu0 %2002, %v580
  %v2004 = vpop.permute.xlu0 %2003
  %2006 = vset.pattern.permute.xlu0 7
  %2007 = vperm.xlu0 %2006, %v581
  %v2008 = vpop.permute.xlu0 %2007
  %2010 = vset.pattern.permute.xlu0 7
  %2011 = vperm.xlu0 %2010, %v582
  %v2012 = vpop.permute.xlu0 %2011
  %2014 = vset.pattern.permute.xlu0 7
  %2015 = vperm.xlu0 %2014, %v583
  %v2016 = vpop.permute.xlu0 %2015
  %2018 = vset.pattern.permute.xlu0 7
  %2019 = vperm.xlu0 %2018, %v584
  %v2020 = vpop.permute.xlu0 %2019
  %2022 = vset.pattern.permute.xlu0 7
  %2023 = vperm.xlu0 %2022, %v585
  %v2024 = vpop.permute.xlu0 %2023
  %v2026 = vperm.slane %v8, 7
  %v2027 = vperm.slane %v10, 7
  %v2028 = vperm.slane %v12, 7
  %v2029 = vperm.slane %v14, 7
  %v2030 = vperm.slane %v16, 7
  %v2031 = vperm.slane %v18, 7
  %v2032 = vperm.slane %v20, 7
  %v2033 = vperm.slane %v22, 7
  %v2034 = vperm.slane %v24, 7
  %v2035 = vperm.slane %v26, 7
  %v2036 = vperm.slane %v28, 7
  %v2037 = vperm.slane %v30, 7
  %v2038 = vperm.slane %v32, 7
  %v2039 = vperm.slane %v34, 7
  %v2040 = vperm.slane %v36, 7
  %v2041 = vperm.slane %v38, 7
  %v2042 = vmul.f32 %v1900, %v2026
  %v2043 = vmul.f32 %v1904, %v2026
  %v2044 = vmul.f32 %v1908, %v2027
  %v2045 = vmul.f32 %v1912, %v2027
  %v2046 = vmul.f32 %v1916, %v2028
  %v2047 = vmul.f32 %v1920, %v2028
  %v2048 = vmul.f32 %v1924, %v2029
  %v2049 = vmul.f32 %v1928, %v2029
  %v2050 = vmul.f32 %v1932, %v2030
  %v2051 = vmul.f32 %v1936, %v2030
  %v2052 = vmul.f32 %v1940, %v2031
  %v2053 = vmul.f32 %v1944, %v2031
  %v2054 = vmul.f32 %v1948, %v2032
  %v2055 = vmul.f32 %v1952, %v2032
  %v2056 = vmul.f32 %v1956, %v2033
  %v2057 = vmul.f32 %v1960, %v2033
  %v2058 = vmul.f32 %v1964, %v2034
  %v2059 = vmul.f32 %v1968, %v2034
  %v2060 = vmul.f32 %v1972, %v2035
  %v2061 = vmul.f32 %v1976, %v2035
  %v2062 = vmul.f32 %v1980, %v2036
  %v2063 = vmul.f32 %v1984, %v2036
  %v2064 = vmul.f32 %v1988, %v2037
  %v2065 = vmul.f32 %v1992, %v2037
  %v2066 = vmul.f32 %v1996, %v2038
  %v2067 = vmul.f32 %v2000, %v2038
  %v2068 = vmul.f32 %v2004, %v2039
  %v2069 = vmul.f32 %v2008, %v2039
  %v2070 = vmul.f32 %v2012, %v2040
  %v2071 = vmul.f32 %v2016, %v2040
  %v2072 = vmul.f32 %v2020, %v2041
  %v2073 = vmul.f32 %v2024, %v2041
  %v2074 = vadd.f32 %v1866, %v2042
  %v2075 = vadd.f32 %v1867, %v2043
  %v2076 = vadd.f32 %v1868, %v2044
  %v2077 = vadd.f32 %v1869, %v2045
  %v2078 = vadd.f32 %v1870, %v2046
  %v2079 = vadd.f32 %v1871, %v2047
  %v2080 = vadd.f32 %v1872, %v2048
  %v2081 = vadd.f32 %v1873, %v2049
  %v2082 = vadd.f32 %v1874, %v2050
  %v2083 = vadd.f32 %v1875, %v2051
  %v2084 = vadd.f32 %v1876, %v2052
  %v2085 = vadd.f32 %v1877, %v2053
  %v2086 = vadd.f32 %v1878, %v2054
  %v2087 = vadd.f32 %v1879, %v2055
  %v2088 = vadd.f32 %v1880, %v2056
  %v2089 = vadd.f32 %v1881, %v2057
  %v2090 = vadd.f32 %v1882, %v2058
  %v2091 = vadd.f32 %v1883, %v2059
  %v2092 = vadd.f32 %v1884, %v2060
  %v2093 = vadd.f32 %v1885, %v2061
  %v2094 = vadd.f32 %v1886, %v2062
  %v2095 = vadd.f32 %v1887, %v2063
  %v2096 = vadd.f32 %v1888, %v2064
  %v2097 = vadd.f32 %v1889, %v2065
  %v2098 = vadd.f32 %v1890, %v2066
  %v2099 = vadd.f32 %v1891, %v2067
  %v2100 = vadd.f32 %v1892, %v2068
  %v2101 = vadd.f32 %v1893, %v2069
  %v2102 = vadd.f32 %v1894, %v2070
  %v2103 = vadd.f32 %v1895, %v2071
  %v2104 = vadd.f32 %v1896, %v2072
  %v2105 = vadd.f32 %v1897, %v2073
  %2106 = vset.pattern.permute.xlu0 8
  %2107 = vperm.xlu0 %2106, %v554
  %v2108 = vpop.permute.xlu0 %2107
  %2110 = vset.pattern.permute.xlu0 8
  %2111 = vperm.xlu0 %2110, %v555
  %v2112 = vpop.permute.xlu0 %2111
  %2114 = vset.pattern.permute.xlu0 8
  %2115 = vperm.xlu0 %2114, %v556
  %v2116 = vpop.permute.xlu0 %2115
  %2118 = vset.pattern.permute.xlu0 8
  %2119 = vperm.xlu0 %2118, %v557
  %v2120 = vpop.permute.xlu0 %2119
  %2122 = vset.pattern.permute.xlu0 8
  %2123 = vperm.xlu0 %2122, %v558
  %v2124 = vpop.permute.xlu0 %2123
  %2126 = vset.pattern.permute.xlu0 8
  %2127 = vperm.xlu0 %2126, %v559
  %v2128 = vpop.permute.xlu0 %2127
  %2130 = vset.pattern.permute.xlu0 8
  %2131 = vperm.xlu0 %2130, %v560
  %v2132 = vpop.permute.xlu0 %2131
  %2134 = vset.pattern.permute.xlu0 8
  %2135 = vperm.xlu0 %2134, %v561
  %v2136 = vpop.permute.xlu0 %2135
  %2138 = vset.pattern.permute.xlu0 8
  %2139 = vperm.xlu0 %2138, %v562
  %v2140 = vpop.permute.xlu0 %2139
  %2142 = vset.pattern.permute.xlu0 8
  %2143 = vperm.xlu0 %2142, %v563
  %v2144 = vpop.permute.xlu0 %2143
  %2146 = vset.pattern.permute.xlu0 8
  %2147 = vperm.xlu0 %2146, %v564
  %v2148 = vpop.permute.xlu0 %2147
  %2150 = vset.pattern.permute.xlu0 8
  %2151 = vperm.xlu0 %2150, %v565
  %v2152 = vpop.permute.xlu0 %2151
  %2154 = vset.pattern.permute.xlu0 8
  %2155 = vperm.xlu0 %2154, %v566
  %v2156 = vpop.permute.xlu0 %2155
  %2158 = vset.pattern.permute.xlu0 8
  %2159 = vperm.xlu0 %2158, %v567
  %v2160 = vpop.permute.xlu0 %2159
  %2162 = vset.pattern.permute.xlu0 8
  %2163 = vperm.xlu0 %2162, %v568
  %v2164 = vpop.permute.xlu0 %2163
  %2166 = vset.pattern.permute.xlu0 8
  %2167 = vperm.xlu0 %2166, %v569
  %v2168 = vpop.permute.xlu0 %2167
  %2170 = vset.pattern.permute.xlu0 8
  %2171 = vperm.xlu0 %2170, %v570
  %v2172 = vpop.permute.xlu0 %2171
  %2174 = vset.pattern.permute.xlu0 8
  %2175 = vperm.xlu0 %2174, %v571
  %v2176 = vpop.permute.xlu0 %2175
  %2178 = vset.pattern.permute.xlu0 8
  %2179 = vperm.xlu0 %2178, %v572
  %v2180 = vpop.permute.xlu0 %2179
  %2182 = vset.pattern.permute.xlu0 8
  %2183 = vperm.xlu0 %2182, %v573
  %v2184 = vpop.permute.xlu0 %2183
  %2186 = vset.pattern.permute.xlu0 8
  %2187 = vperm.xlu0 %2186, %v574
  %v2188 = vpop.permute.xlu0 %2187
  %2190 = vset.pattern.permute.xlu0 8
  %2191 = vperm.xlu0 %2190, %v575
  %v2192 = vpop.permute.xlu0 %2191
  %2194 = vset.pattern.permute.xlu0 8
  %2195 = vperm.xlu0 %2194, %v576
  %v2196 = vpop.permute.xlu0 %2195
  %2198 = vset.pattern.permute.xlu0 8
  %2199 = vperm.xlu0 %2198, %v577
  %v2200 = vpop.permute.xlu0 %2199
  %2202 = vset.pattern.permute.xlu0 8
  %2203 = vperm.xlu0 %2202, %v578
  %v2204 = vpop.permute.xlu0 %2203
  %2206 = vset.pattern.permute.xlu0 8
  %2207 = vperm.xlu0 %2206, %v579
  %v2208 = vpop.permute.xlu0 %2207
  %2210 = vset.pattern.permute.xlu0 8
  %2211 = vperm.xlu0 %2210, %v580
  %v2212 = vpop.permute.xlu0 %2211
  %2214 = vset.pattern.permute.xlu0 8
  %2215 = vperm.xlu0 %2214, %v581
  %v2216 = vpop.permute.xlu0 %2215
  %2218 = vset.pattern.permute.xlu0 8
  %2219 = vperm.xlu0 %2218, %v582
  %v2220 = vpop.permute.xlu0 %2219
  %2222 = vset.pattern.permute.xlu0 8
  %2223 = vperm.xlu0 %2222, %v583
  %v2224 = vpop.permute.xlu0 %2223
  %2226 = vset.pattern.permute.xlu0 8
  %2227 = vperm.xlu0 %2226, %v584
  %v2228 = vpop.permute.xlu0 %2227
  %2230 = vset.pattern.permute.xlu0 8
  %2231 = vperm.xlu0 %2230, %v585
  %v2232 = vpop.permute.xlu0 %2231
  %v2234 = vperm.slane %v9, 0
  %v2235 = vperm.slane %v11, 0
  %v2236 = vperm.slane %v13, 0
  %v2237 = vperm.slane %v15, 0
  %v2238 = vperm.slane %v17, 0
  %v2239 = vperm.slane %v19, 0
  %v2240 = vperm.slane %v21, 0
  %v2241 = vperm.slane %v23, 0
  %v2242 = vperm.slane %v25, 0
  %v2243 = vperm.slane %v27, 0
  %v2244 = vperm.slane %v29, 0
  %v2245 = vperm.slane %v31, 0
  %v2246 = vperm.slane %v33, 0
  %v2247 = vperm.slane %v35, 0
  %v2248 = vperm.slane %v37, 0
  %v2249 = vperm.slane %v39, 0
  %v2250 = vmul.f32 %v2108, %v2234
  %v2251 = vmul.f32 %v2112, %v2234
  %v2252 = vmul.f32 %v2116, %v2235
  %v2253 = vmul.f32 %v2120, %v2235
  %v2254 = vmul.f32 %v2124, %v2236
  %v2255 = vmul.f32 %v2128, %v2236
  %v2256 = vmul.f32 %v2132, %v2237
  %v2257 = vmul.f32 %v2136, %v2237
  %v2258 = vmul.f32 %v2140, %v2238
  %v2259 = vmul.f32 %v2144, %v2238
  %v2260 = vmul.f32 %v2148, %v2239
  %v2261 = vmul.f32 %v2152, %v2239
  %v2262 = vmul.f32 %v2156, %v2240
  %v2263 = vmul.f32 %v2160, %v2240
  %v2264 = vmul.f32 %v2164, %v2241
  %v2265 = vmul.f32 %v2168, %v2241
  %v2266 = vmul.f32 %v2172, %v2242
  %v2267 = vmul.f32 %v2176, %v2242
  %v2268 = vmul.f32 %v2180, %v2243
  %v2269 = vmul.f32 %v2184, %v2243
  %v2270 = vmul.f32 %v2188, %v2244
  %v2271 = vmul.f32 %v2192, %v2244
  %v2272 = vmul.f32 %v2196, %v2245
  %v2273 = vmul.f32 %v2200, %v2245
  %v2274 = vmul.f32 %v2204, %v2246
  %v2275 = vmul.f32 %v2208, %v2246
  %v2276 = vmul.f32 %v2212, %v2247
  %v2277 = vmul.f32 %v2216, %v2247
  %v2278 = vmul.f32 %v2220, %v2248
  %v2279 = vmul.f32 %v2224, %v2248
  %v2280 = vmul.f32 %v2228, %v2249
  %v2281 = vmul.f32 %v2232, %v2249
  %v2282 = vadd.f32 %v2074, %v2250
  %v2283 = vadd.f32 %v2075, %v2251
  %v2284 = vadd.f32 %v2076, %v2252
  %v2285 = vadd.f32 %v2077, %v2253
  %v2286 = vadd.f32 %v2078, %v2254
  %v2287 = vadd.f32 %v2079, %v2255
  %v2288 = vadd.f32 %v2080, %v2256
  %v2289 = vadd.f32 %v2081, %v2257
  %v2290 = vadd.f32 %v2082, %v2258
  %v2291 = vadd.f32 %v2083, %v2259
  %v2292 = vadd.f32 %v2084, %v2260
  %v2293 = vadd.f32 %v2085, %v2261
  %v2294 = vadd.f32 %v2086, %v2262
  %v2295 = vadd.f32 %v2087, %v2263
  %v2296 = vadd.f32 %v2088, %v2264
  %v2297 = vadd.f32 %v2089, %v2265
  %v2298 = vadd.f32 %v2090, %v2266
  %v2299 = vadd.f32 %v2091, %v2267
  %v2300 = vadd.f32 %v2092, %v2268
  %v2301 = vadd.f32 %v2093, %v2269
  %v2302 = vadd.f32 %v2094, %v2270
  %v2303 = vadd.f32 %v2095, %v2271
  %v2304 = vadd.f32 %v2096, %v2272
  %v2305 = vadd.f32 %v2097, %v2273
  %v2306 = vadd.f32 %v2098, %v2274
  %v2307 = vadd.f32 %v2099, %v2275
  %v2308 = vadd.f32 %v2100, %v2276
  %v2309 = vadd.f32 %v2101, %v2277
  %v2310 = vadd.f32 %v2102, %v2278
  %v2311 = vadd.f32 %v2103, %v2279
  %v2312 = vadd.f32 %v2104, %v2280
  %v2313 = vadd.f32 %v2105, %v2281
  %v2314 = vsel %vm48, 1, 0
  %v2315 = vsel %vm49, 1, 0
  %vm2316 = vcmp.eq.s32.totalorder %v2314, 1
  %vm2317 = vcmp.eq.s32.totalorder %v2315, 1
  %v2318 = vsel %vm2316, %v2282, %v8
  %v2319 = vsel %vm2317, %v2283, %v9
  %v2320 = vsel %vm2316, %v2284, %v10
  %v2321 = vsel %vm2317, %v2285, %v11
  %v2322 = vsel %vm2316, %v2286, %v12
  %v2323 = vsel %vm2317, %v2287, %v13
  %v2324 = vsel %vm2316, %v2288, %v14
  %v2325 = vsel %vm2317, %v2289, %v15
  %v2326 = vsel %vm2316, %v2290, %v16
  %v2327 = vsel %vm2317, %v2291, %v17
  %v2328 = vsel %vm2316, %v2292, %v18
  %v2329 = vsel %vm2317, %v2293, %v19
  %v2330 = vsel %vm2316, %v2294, %v20
  %v2331 = vsel %vm2317, %v2295, %v21
  %v2332 = vsel %vm2316, %v2296, %v22
  %v2333 = vsel %vm2317, %v2297, %v23
  %v2334 = vsel %vm2316, %v2298, %v24
  %v2335 = vsel %vm2317, %v2299, %v25
  %v2336 = vsel %vm2316, %v2300, %v26
  %v2337 = vsel %vm2317, %v2301, %v27
  %v2338 = vsel %vm2316, %v2302, %v28
  %v2339 = vsel %vm2317, %v2303, %v29
  %v2340 = vsel %vm2316, %v2304, %v30
  %v2341 = vsel %vm2317, %v2305, %v31
  %v2342 = vsel %vm2316, %v2306, %v32
  %v2343 = vsel %vm2317, %v2307, %v33
  %v2344 = vsel %vm2316, %v2308, %v34
  %v2345 = vsel %vm2317, %v2309, %v35
  %v2346 = vsel %vm2316, %v2310, %v36
  %v2347 = vsel %vm2317, %v2311, %v37
  %v2348 = vsel %vm2316, %v2312, %v38
  %v2349 = vsel %vm2317, %v2313, %v39
  %2350 = vst.msk [vmem:[%s1] sm:$0xff] %vm89, %v2318
  %vm2351 = vcmask 286720
  %2352 = vst.msk [vmem:[%s1 + $0x8] sm:$0x1] %vm2351, %v2319
  %2353 = vst.msk [vmem:[%s1 + $0x10] sm:$0xff] %vm89, %v2320
  %2354 = vst.msk [vmem:[%s1 + $0x18] sm:$0x1] %vm2351, %v2321
  %2355 = vst.msk [vmem:[%s1 + $0x20] sm:$0xff] %vm89, %v2322
  %2356 = vst.msk [vmem:[%s1 + $0x28] sm:$0x1] %vm2351, %v2323
  %2357 = vst.msk [vmem:[%s1 + $0x30] sm:$0xff] %vm89, %v2324
  %2358 = vst.msk [vmem:[%s1 + $0x38] sm:$0x1] %vm2351, %v2325
  %2359 = vst.msk [vmem:[%s1 + $0x40] sm:$0xff] %vm89, %v2326
  %2360 = vst.msk [vmem:[%s1 + $0x48] sm:$0x1] %vm2351, %v2327
  %2361 = vst.msk [vmem:[%s1 + $0x50] sm:$0xff] %vm89, %v2328
  %2362 = vst.msk [vmem:[%s1 + $0x58] sm:$0x1] %vm2351, %v2329
  %2363 = vst.msk [vmem:[%s1 + $0x60] sm:$0xff] %vm89, %v2330
  %2364 = vst.msk [vmem:[%s1 + $0x68] sm:$0x1] %vm2351, %v2331
  %2365 = vst.msk [vmem:[%s1 + $0x70] sm:$0xff] %vm89, %v2332
  %2366 = vst.msk [vmem:[%s1 + $0x78] sm:$0x1] %vm2351, %v2333
  %2367 = vst.msk [vmem:[%s1 + $0x80] sm:$0xff] %vm89, %v2334
  %2368 = vst.msk [vmem:[%s1 + $0x88] sm:$0x1] %vm2351, %v2335
  %2369 = vst.msk [vmem:[%s1 + $0x90] sm:$0xff] %vm89, %v2336
  %2370 = vst.msk [vmem:[%s1 + $0x98] sm:$0x1] %vm2351, %v2337
  %2371 = vst.msk [vmem:[%s1 + $0xa0] sm:$0xff] %vm89, %v2338
  %2372 = vst.msk [vmem:[%s1 + $0xa8] sm:$0x1] %vm2351, %v2339
  %2373 = vst.msk [vmem:[%s1 + $0xb0] sm:$0xff] %vm89, %v2340
  %2374 = vst.msk [vmem:[%s1 + $0xb8] sm:$0x1] %vm2351, %v2341
  %2375 = vst.msk [vmem:[%s1 + $0xc0] sm:$0xff] %vm89, %v2342
  %2376 = vst.msk [vmem:[%s1 + $0xc8] sm:$0x1] %vm2351, %v2343
  %2377 = vst.msk [vmem:[%s1 + $0xd0] sm:$0xff] %vm89, %v2344
  %2378 = vst.msk [vmem:[%s1 + $0xd8] sm:$0x1] %vm2351, %v2345
  %2379 = vst.msk [vmem:[%s1 + $0xe0] sm:$0xff] %vm89, %v2346
  %2380 = vst.msk [vmem:[%s1 + $0xe8] sm:$0x1] %vm2351, %v2347
  %2381 = vst.msk [vmem:[%s1 + $0xf0] sm:$0xff] %vm89, %v2348
  %2382 = vst.msk [vmem:[%s1 + $0xf8] sm:$0x1] %vm2351, %v2349
  // Predicated region
  $region6: #{tpu_custom_call.1} parent=0 // pred_check
    _
  $region7: #{tpu_custom_call.1} parent=0 // pred_check_branch
    %2384 = sbr.rel (0) target = $region9
  $region8: #{tpu_custom_call.1} parent=0 // pred_region
    _
  $region9: #{tpu_custom_call.1} parent=0 // pred_fallthru
    _
  // Predicated region
  $region10: #{tpu_custom_call.1} parent=0 // pred_check
    _
  $region11: #{tpu_custom_call.1} parent=0 // pred_check_branch
    %2386 = sbr.rel (0) target = $region13
  $region12: #{tpu_custom_call.1} parent=0 // pred_region
    _
  $region13: #{tpu_custom_call.1} parent=0 // pred_fallthru
    _

</llo_original>
